<compile_context>
chip_gen: v7x
topology: tpu7x:2x2x1
jax: 0.10.0
libtpu: 0.0.40
codegen_flags: <defaults>
</compile_context>

<pallas_src>
import math

import jax
import jax.numpy as jnp
import numpy as np
from jax import lax
from jax.experimental import pallas as pl
from jax.experimental.pallas import tpu as pltpu


def _split_channels(channels, num_groups):
    split = [channels // num_groups for _ in range(num_groups)]
    split[0] += channels - sum(split)
    return split


def _round_up(x, m):
    return ((x + m - 1) // m) * m


def _make_conv_kernel(K, stride, tile_ho, Wo, cin, cout_pad):
    """im2col block kernel: build (TILE_M, K*K*Cin) patches, one MXU matmul."""
    tile_m = tile_ho * Wo

    def kernel(x_ref, w_ref, o_ref):
        # x_ref: (Hp, Wp, Cin)        one padded batch element (resident across ho blocks)
        # w_ref: (K*K*Cin, Cout_pad)  flattened weights, im2col layout
        # o_ref: (tile_ho, Wo, Cout_pad)  lane-dense output block
        hb = pl.program_id(1)
        row0 = pl.multiple_of(hb * (tile_ho * stride), tile_ho * stride)

        patches = []
        for kh in range(K):                      # static tap loops (K is a Python int)
            if stride == 1:
                rows = x_ref[pl.ds(row0 + kh, tile_ho), :, :]          # (tile_ho, Wp, Cin)
            else:
                span = (tile_ho - 1) * stride + 1
                rows = x_ref[pl.ds(row0 + kh, span), :, :][::stride]   # (tile_ho, Wp, Cin)
            for kw in range(K):
                # static (strided) window along W for this tap
                win = rows[:, kw:kw + (Wo - 1) * stride + 1:stride, :]  # (tile_ho, Wo, Cin)
                patches.append(win)

        p = patches[0] if len(patches) == 1 else jnp.concatenate(patches, axis=-1)
        p = p.reshape(tile_m, K * K * cin)                              # (TILE_M, K*K*Cin)
        acc = jnp.dot(p, w_ref[...], preferred_element_type=jnp.float32)  # (TILE_M, Cout_pad)
        o_ref[...] = acc.reshape(tile_ho, Wo, cout_pad).astype(o_ref.dtype)

    return kernel


def _conv_group_pallas(xg, w_oihw, stride, Ho, Wo, tile_ho, out_dtype):
    """Single-group bias-free conv. xg: (N, Hp, Wp, Cin), already padded + cast."""
    N, Hp, Wp, Cin = xg.shape
    Cout, Cin_w, K, K2 = w_oihw.shape
    assert Cin == Cin_w and K == K2
    ho_pad = _round_up(Ho, tile_ho)
    cout_pad = _round_up(Cout, 128)
    assert (ho_pad - 1) * stride + K <= Hp, "input not padded enough for the H tiling"

    # im2col weight layout: (O, I, Kh, Kw) -> (Kh, Kw, I, O) -> (K*K*Cin, Cout_pad)
    w = jnp.transpose(w_oihw, (2, 3, 1, 0)).reshape(K * K * Cin, Cout)
    w = jnp.pad(w, ((0, 0), (0, cout_pad - Cout))).astype(xg.dtype)

    out = pl.pallas_call(
        _make_conv_kernel(K, stride, tile_ho, Wo, Cin, cout_pad),
        out_shape=jax.ShapeDtypeStruct((N, ho_pad, Wo, cout_pad), out_dtype),
        grid=(N, ho_pad // tile_ho),
        in_specs=[
            # one padded batch element per block (re-fetched only when n changes)
            pl.BlockSpec((None, Hp, Wp, Cin), lambda n, hb: (n, 0, 0, 0)),
            # small flattened weights, resident
            pl.BlockSpec((K * K * Cin, cout_pad), lambda n, hb: (0, 0)),
        ],
        out_specs=pl.BlockSpec((None, tile_ho, Wo, cout_pad),
                               lambda n, hb: (n, hb, 0, 0)),
        compiler_params=pltpu.CompilerParams(
            dimension_semantics=("parallel", "parallel"),
            vmem_limit_bytes=32 * 1024 * 1024),
    )(xg, w)

    # slice off the Ho / Cout padding
    return out[:, :Ho, :, :Cout]


class GroupedConv2dPallas:
    """JAX/Pallas re-implementation of GroupedConv2d (forward only)."""

    def __init__(self, in_channels, out_channels, kernel_size, stride=1, padding=0,
                 *, key, compute_dtype=jnp.bfloat16):
        self.num_groups = len(kernel_size)
        self.kernel_size = list(kernel_size)
        self.split_in_channels = _split_channels(in_channels, self.num_groups)
        self.split_out_channels = _split_channels(out_channels, self.num_groups)
        self.stride = stride
        self.padding = padding
        self.compute_dtype = compute_dtype
        self.weights = []
        keys = jax.random.split(key, self.num_groups)
        for i in range(self.num_groups):
            k = self.kernel_size[i]
            cin, cout = self.split_in_channels[i], self.split_out_channels[i]
            bound = 1.0 / math.sqrt(cin * k * k)  # matches nn.Conv2d kaiming-uniform bound
            w = jax.random.uniform(keys[i], (cout, cin, k, k),
                                   minval=-bound, maxval=bound, dtype=jnp.float32)
            self.weights.append(w)

    def __call__(self, x):
        N, C, H, W = x.shape
        s, p = self.stride, self.padding
        out_hw = [((H + 2 * p - k) // s + 1, (W + 2 * p - k) // s + 1)
                  for k in self.kernel_size]
        assert all(hw == out_hw[0] for hw in out_hw), (
            "all groups must produce identical spatial dims (shared stride/padding)")
        Ho, Wo = out_hw[0]

        # TILE_HO output rows per grid step; aim for >=256 rows in the matmul M dim.
        tile_ho = max(1, min(Ho, -(-256 // Wo)))
        ho_pad = _round_up(Ho, tile_ho)

        # Layout + spatial padding once for all groups (NCHW -> NHWC, channels on lanes),
        # plus extra bottom rows so the padded-Ho tiles never read out of bounds.
        x_nhwc = jnp.transpose(x, (0, 2, 3, 1))
        need_h = (ho_pad - 1) * s + max(self.kernel_size)
        extra_h = max(0, need_h - (H + 2 * p))
        x_padded = jnp.pad(x_nhwc, ((0, 0), (p, p + extra_h), (p, p), (0, 0)))
        x_c = x_padded.astype(self.compute_dtype)

        # TODO(synk): fuse all groups into one pallas_call (scalar-prefetched per-group
        # channel offsets / kernel sizes) so small groups share one lane-dense output
        # slab and the XLA concat disappears.
        # TODO(synk): for very large H*W*Cin (v7x 64 MiB VMEM), tile H with halo blocks
        # or manual double-buffered DMA instead of one full padded batch element per block.
        outs = []
        start = 0
        for i in range(self.num_groups):
            cin = self.split_in_channels[i]
            xg = x_c[..., start:start + cin]
            start += cin
            outs.append(_conv_group_pallas(xg, self.weights[i], s, Ho, Wo,
                                           tile_ho, x.dtype))
        y = outs[0] if self.num_groups == 1 else jnp.concatenate(outs, axis=-1)
        return jnp.transpose(y, (0, 3, 1, 2))  # back to NCHW


def _reference_forward(mod, x):
    """Pure-JAX reference (lax conv) on identically bf16-cast inputs/weights."""
    cd = mod.compute_dtype
    s, p = mod.stride, mod.padding
    outs = []
    start = 0
    for i in range(mod.num_groups):
        cin = mod.split_in_channels[i]
        xg = x[:, start:start + cin].astype(cd)
        start += cin
        o = lax.conv_general_dilated(
            xg, mod.weights[i].astype(cd),
            window_strides=(s, s), padding=[(p, p)] * 2,
            dimension_numbers=("NCHW", "OIHW", "NCHW"),
            preferred_element_type=jnp.float32).astype(x.dtype)
        outs.append(o)
    return outs[0] if mod.num_groups == 1 else jnp.concatenate(outs, axis=1)


if __name__ == "__main__":
    key = jax.random.PRNGKey(0)
    kx, kw = jax.random.split(key)

    # small shapes consistent with the module: NCHW input, two groups
    N, C_in, H, W = 2, 4, 16, 16
    C_out = 6
    kernel_size = [3, 3]   # groups share `padding`, so spatial dims must match for concat
    stride, padding = 1, 1

    x = jax.random.normal(kx, (N, C_in, H, W), dtype=jnp.float32)

    mod = GroupedConv2dPallas(C_in, C_out, kernel_size, stride=stride,
                              padding=padding, key=kw)

    out = jax.block_until_ready(mod(x))
    ref = jax.block_until_ready(_reference_forward(mod, x))

    assert out.shape == (N, C_out, H, W), out.shape
    err = np.max(np.abs(np.asarray(out) - np.asarray(ref)))
    assert np.allclose(np.asarray(out), np.asarray(ref), atol=1e-2, rtol=1e-2), err

    print("KERNEL_OK")
</pallas_src>

<mosaic_0001>
module attributes {stable_mosaic.version = 11 : i64} {
  func.func @kernel(%arg0: i32, %arg1: i32, %arg2: memref<1x18x18x2xbf16, #tpu.memory_space<vmem>>, %arg3: memref<18x128xbf16, #tpu.memory_space<vmem>>, %arg4: memref<1x16x16x128xf32, #tpu.memory_space<vmem>>) attributes {dimension_semantics = [#tpu.dimension_semantics<parallel>, #tpu.dimension_semantics<parallel>], iteration_bounds = array<i64: 2, 1>, scalar_prefetch = 0 : i64, scratch_operands = 0 : i64, tpu.core_type = #tpu.core_type<tc>, window_params = [{transform_indices = @transform_0, window_bounds = array<i64: 1, 18, 18, 2>}, {pipeline_mode = #tpu.pipeline_mode<synchronous>, transform_indices = @transform_1, window_bounds = array<i64: 18, 128>}, {transform_indices = @transform_2, window_bounds = array<i64: 1, 16, 16, 128>}]} {
    %c16_i32 = arith.constant 16 : i32
    %0 = arith.muli %arg1, %c16_i32 : i32
    %1 = tpu.assume_multiple %0, 16 : i32
    %c0_i32 = arith.constant 0 : i32
    %2 = arith.addi %1, %c0_i32 : i32
    %c0 = arith.constant 0 : index
    %3 = arith.index_cast %2 : i32 to index
    %c0_0 = arith.constant 0 : index
    %c0_1 = arith.constant 0 : index
    %4 = vector.load %arg2[%c0, %3, %c0_0, %c0_1] : memref<1x18x18x2xbf16, #tpu.memory_space<vmem>>, vector<1x16x18x2xbf16>
    %5 = vector.shape_cast %4 : vector<1x16x18x2xbf16> to vector<16x18x2xbf16>
    %6 = vector.extract_strided_slice %5 {offsets = [0, 0, 0], sizes = [16, 16, 2], strides = [1, 1, 1]} : vector<16x18x2xbf16> to vector<16x16x2xbf16>
    %7 = vector.extract_strided_slice %5 {offsets = [0, 1, 0], sizes = [16, 16, 2], strides = [1, 1, 1]} : vector<16x18x2xbf16> to vector<16x16x2xbf16>
    %8 = vector.extract_strided_slice %5 {offsets = [0, 2, 0], sizes = [16, 16, 2], strides = [1, 1, 1]} : vector<16x18x2xbf16> to vector<16x16x2xbf16>
    %c1_i32 = arith.constant 1 : i32
    %9 = arith.addi %1, %c1_i32 : i32
    %c0_2 = arith.constant 0 : index
    %10 = arith.index_cast %9 : i32 to index
    %c0_3 = arith.constant 0 : index
    %c0_4 = arith.constant 0 : index
    %11 = vector.load %arg2[%c0_2, %10, %c0_3, %c0_4] : memref<1x18x18x2xbf16, #tpu.memory_space<vmem>>, vector<1x16x18x2xbf16>
    %12 = vector.shape_cast %11 : vector<1x16x18x2xbf16> to vector<16x18x2xbf16>
    %13 = vector.extract_strided_slice %12 {offsets = [0, 0, 0], sizes = [16, 16, 2], strides = [1, 1, 1]} : vector<16x18x2xbf16> to vector<16x16x2xbf16>
    %14 = vector.extract_strided_slice %12 {offsets = [0, 1, 0], sizes = [16, 16, 2], strides = [1, 1, 1]} : vector<16x18x2xbf16> to vector<16x16x2xbf16>
    %15 = vector.extract_strided_slice %12 {offsets = [0, 2, 0], sizes = [16, 16, 2], strides = [1, 1, 1]} : vector<16x18x2xbf16> to vector<16x16x2xbf16>
    %c2_i32 = arith.constant 2 : i32
    %16 = arith.addi %1, %c2_i32 : i32
    %c0_5 = arith.constant 0 : index
    %17 = arith.index_cast %16 : i32 to index
    %c0_6 = arith.constant 0 : index
    %c0_7 = arith.constant 0 : index
    %18 = vector.load %arg2[%c0_5, %17, %c0_6, %c0_7] : memref<1x18x18x2xbf16, #tpu.memory_space<vmem>>, vector<1x16x18x2xbf16>
    %19 = vector.shape_cast %18 : vector<1x16x18x2xbf16> to vector<16x18x2xbf16>
    %20 = vector.extract_strided_slice %19 {offsets = [0, 0, 0], sizes = [16, 16, 2], strides = [1, 1, 1]} : vector<16x18x2xbf16> to vector<16x16x2xbf16>
    %21 = vector.extract_strided_slice %19 {offsets = [0, 1, 0], sizes = [16, 16, 2], strides = [1, 1, 1]} : vector<16x18x2xbf16> to vector<16x16x2xbf16>
    %22 = vector.extract_strided_slice %19 {offsets = [0, 2, 0], sizes = [16, 16, 2], strides = [1, 1, 1]} : vector<16x18x2xbf16> to vector<16x16x2xbf16>
    %23 = tpu.concatenate %6, %7, %8, %13, %14, %15, %20, %21, %22 in 2 : vector<16x16x2xbf16>, vector<16x16x2xbf16>, vector<16x16x2xbf16>, vector<16x16x2xbf16>, vector<16x16x2xbf16>, vector<16x16x2xbf16>, vector<16x16x2xbf16>, vector<16x16x2xbf16>, vector<16x16x2xbf16> -> vector<16x16x18xbf16>
    %24 = vector.shape_cast %23 : vector<16x16x18xbf16> to vector<256x18xbf16>
    %c0_8 = arith.constant 0 : index
    %c0_9 = arith.constant 0 : index
    %25 = vector.load %arg3[%c0_8, %c0_9] : memref<18x128xbf16, #tpu.memory_space<vmem>>, vector<18x128xbf16>
    %cst = arith.constant dense<0.000000e+00> : vector<256x128xf32>
    %26 = tpu.matmul %24, %25, %cst {dimension_numbers = #tpu.dot_dimension_numbers<[1], [0], [0], [1], [0, 0, 1, 1], [], []>} : vector<256x18xbf16>, vector<18x128xbf16>, vector<256x128xf32> -> vector<256x128xf32>
    %27 = vector.shape_cast %26 : vector<256x128xf32> to vector<16x16x128xf32>
    %c0_10 = arith.constant 0 : index
    %c0_11 = arith.constant 0 : index
    %c0_12 = arith.constant 0 : index
    %c0_13 = arith.constant 0 : index
    %28 = vector.load %arg4[%c0_10, %c0_11, %c0_12, %c0_13] : memref<1x16x16x128xf32, #tpu.memory_space<vmem>>, vector<1x16x16x128xf32>
    %29 = vector.shape_cast %28 : vector<1x16x16x128xf32> to vector<16x16x128xf32>
    %30 = vector.shape_cast %27 : vector<16x16x128xf32> to vector<1x16x16x128xf32>
    tpu.vector_store %arg4[%c0_10, %c0_11, %c0_12, %c0_13], %30 {strides = array<i32>} : memref<1x16x16x128xf32, #tpu.memory_space<vmem>>, vector<1x16x16x128xf32>,
    return
  }
  func.func @transform_0(%arg0: i32, %arg1: i32) -> (i32, i32, i32, i32) {
    %c0_i32 = arith.constant 0 : i32
    %c0_i32_0 = arith.constant 0 : i32
    %c0_i32_1 = arith.constant 0 : i32
    %c0_i32_2 = arith.constant 0 : i32
    return %arg0, %c0_i32, %c0_i32_0, %c0_i32_1 : i32, i32, i32, i32
  }
  func.func @transform_1(%arg0: i32, %arg1: i32) -> (i32, i32) {
    %c0_i32 = arith.constant 0 : i32
    %c0_i32_0 = arith.constant 0 : i32
    %c0_i32_1 = arith.constant 0 : i32
    return %c0_i32, %c0_i32_0 : i32, i32
  }
  func.func @transform_2(%arg0: i32, %arg1: i32) -> (i32, i32, i32, i32) {
    %c0_i32 = arith.constant 0 : i32
    %c0_i32_0 = arith.constant 0 : i32
    %c0_i32_1 = arith.constant 0 : i32
    return %arg0, %arg1, %c0_i32, %c0_i32_0 : i32, i32, i32, i32
  }
}

</mosaic_0001>

<llo_original>
// kernel: tpu_custom_call.1
$region0: #{tpu_custom_call.1}
  #allocation0 [shape = 'u32[]', space=smem, size = 0x4, offset = 0x4, fixed_abs, tag = 'smem constant byte address 0x4 - core index']
  #allocation1 [shape = 'u32[144,128]{1,0:T(1,128)}', space=vmem, size = 0x12000, scoped, tag = 'internal scratch']
  %s0 = inlined_call_operand.vmem [shape: bf16[2,18,18,2], index: 0, kind: input, shape index: {}]
  %s1 = inlined_call_operand.vmem [shape: bf16[18,128], index: 1, kind: input, shape index: {}]
  %s2 = inlined_call_operand.hbm [shape: f32[2,16,16,128], index: 2, kind: output, shape index: {}]
  %s3 = sld [smem:[#allocation0]]
  $region41: #{tpu_custom_call.1} parent=0
    _
  %s5 = ssub.s32 1, %s3
  %s6 = scalar_select 0, %s5, %s3
  $region1: #{tpu_custom_call.1} parent=0
    #allocation2 [shape = 'u8[262144]{0}', space=vmem, size = 0x40000, scoped, tag = 'output window, operand 0']
    #allocation3 [shape = 's32[2]{0}', space=sflag, size = 0x8, scoped, tag = 'scoped memory for tpu_custom_call.1']
    %7 = vsyncpa [#allocation3], 0
    %s8 = scalar_lea.sflag [#allocation3], 1
    %9 = vsyncpa %s8, 0
    loop: start=0, step=1, limit=4
    $region2: #{tpu_custom_call.1} parent=1 // loop_pre_header
      _
    $region3: #{tpu_custom_call.1} parent=1 // loop_header
      %s11 = sphi 0, %s15
      %p12 = scmp.ge.s32.totalorder %s11, 4
      %s18 = sphi 0, %s30
      %s19 = sphi 0, %s26
      %s20 = sphi 0, %s18
      %s21 = sphi 0, %s19
      %s22 = sphi 0, %s20
      %s23 = sphi 0, %s21
      %s33 = sphi 0, %s35
      %s36 = sphi 0, %s33
      %s37 = sphi 0, %s36
      %s53 = sphi 0, %s37
      %s57 = sphi 0, %s57
      %s59 = sphi 0, %s57
      %s60 = sphi 0, %s59
      %s74 = sphi 0, %s60
      %s82 = sphi 0, %s84
      %s85 = sphi 0, %s82
      %s86 = sphi 0, %s85
      %s102 = sphi 0, %s86
    $region4: #{tpu_custom_call.1} parent=1 // loop_header_branch
      %14 = sbr.rel (%p12) target = $region8
    $region5: #{tpu_custom_call.1} parent=1 // loop_body
      %s16 = ssub.s32 %s11, 1
      %s17 = ssub.s32 %s11, 2
      %s24 = sadd.s32 1, %s19
      %p25 = scmp.ge.s32.totalorder %s24, 1
      %s26 = scalar_select %p25, 0, %s24
      %s27 = sadd.s32 1, %s18
      %s28 = scalar_select %p25, %s27, %s18
      %p29 = scmp.ge.s32.totalorder %s28, 2
      %s30 = scalar_select %p29, 0, %s28
      %s31 = ssub.s32 %s18, %s30
      %p32 = scmp.eq.s32.totalorder %s31, 0
      %s34 = sadd.s32 %s33, 1
      %s35 = scalar_select %p32, %s33, %s34
      %p38 = pneg %p32
      %p39 = scmp.eq.s32.totalorder %s11, 1
      %p40 = por %p38, %p39
      %p41 = scmp.ne.s32.totalorder %s33, %s36
      %p42 = scmp.eq.s32.totalorder %s11, 0
      %p43 = por %p41, %p42
      %p44 = scmp.ne.s32.totalorder %s33, %s36
      %p45 = scmp.eq.s32.totalorder %s16, 1
      %p46 = por %p44, %p45
      %p47 = scmp.ne.s32.totalorder %s36, %s37
      %p48 = scmp.eq.s32.totalorder %s16, 0
      %p49 = por %p47, %p48
      %p50 = scmp.ne.s32.totalorder %s36, %s37
      %p51 = scmp.eq.s32.totalorder %s17, 1
      %p52 = por %p50, %p51
      %p54 = scmp.ne.s32.totalorder %s37, %s53
      %p55 = scmp.eq.s32.totalorder %s17, 0
      %p56 = por %p54, %p55
      %s58 = sadd.s32 %s57, 1
      %p61 = scmp.eq.s32.totalorder %s11, 1
      %p62 = scmp.ne.s32.totalorder %s57, %s59
      %p63 = scmp.eq.s32.totalorder %s11, 0
      %p64 = por %p62, %p63
      %p65 = scmp.ne.s32.totalorder %s57, %s59
      %p66 = scmp.eq.s32.totalorder %s16, 1
      %p67 = por %p65, %p66
      %p68 = scmp.ne.s32.totalorder %s59, %s60
      %p69 = scmp.eq.s32.totalorder %s16, 0
      %p70 = por %p68, %p69
      %p71 = scmp.ne.s32.totalorder %s59, %s60
      %p72 = scmp.eq.s32.totalorder %s17, 1
      %p73 = por %p71, %p72
      %p75 = scmp.ne.s32.totalorder %s60, %s74
      %p76 = scmp.eq.s32.totalorder %s17, 0
      %p77 = por %p75, %p76
      %s78 = ssub.s32 %s18, %s30
      %s79 = ssub.s32 %s19, %s26
      %s80 = sor.u32 %s78, %s79
      %p81 = scmp.eq.s32.totalorder %s80, 0
      %s83 = sadd.s32 %s82, 1
      %s84 = scalar_select %p81, %s82, %s83
      %p87 = pneg %p81
      %p88 = scmp.eq.s32.totalorder %s11, 1
      %p89 = por %p87, %p88
      %p90 = scmp.ne.s32.totalorder %s82, %s85
      %p91 = scmp.eq.s32.totalorder %s11, 0
      %p92 = por %p90, %p91
      %p93 = scmp.ne.s32.totalorder %s82, %s85
      %p94 = scmp.eq.s32.totalorder %s16, 1
      %p95 = por %p93, %p94
      %p96 = scmp.ne.s32.totalorder %s85, %s86
      %p97 = scmp.eq.s32.totalorder %s16, 0
      %p98 = por %p96, %p97
      %p99 = scmp.ne.s32.totalorder %s85, %s86
      %p100 = scmp.eq.s32.totalorder %s17, 1
      %p101 = por %p99, %p100
      %p103 = scmp.ne.s32.totalorder %s86, %s102
      %p104 = scmp.eq.s32.totalorder %s17, 0
      %p105 = por %p103, %p104
      %p106 = scmp.le.s32.totalorder 1, %s11
      %p107 = scmp.lt.s32.totalorder %s11, 3
      %p108 = pnand %p106, %p107
      %p109 = pneg %p108
      // Predicated region
      $region9: #{tpu_custom_call.1} parent=5 // pred_check
        _
      $region10: #{tpu_custom_call.1} parent=5 // pred_check_branch
        %111 = sbr.rel (%p108) target = $region12
      $region11: #{tpu_custom_call.1} parent=5 // pred_region
        %s112 = ssub.s32 %s11, 1
        // Predicated region
        $region13: #{tpu_custom_call.1} parent=11 // pred_check
          %p113 = pneg %p70
        $region14: #{tpu_custom_call.1} parent=11 // pred_check_branch
          %115 = sbr.rel (%p113) target = $region16
        $region15: #{tpu_custom_call.1} parent=11 // pred_region
          _
        $region16: #{tpu_custom_call.1} parent=11 // pred_fallthru
          _
      $region12: #{tpu_custom_call.1} parent=5 // pred_fallthru
        _
      %p116 = scmp.lt.s32.totalorder %s11, 2
      // Predicated region
      $region17: #{tpu_custom_call.1} parent=5 // pred_check
        %p117 = pneg %p116
      $region18: #{tpu_custom_call.1} parent=5 // pred_check_branch
        %119 = sbr.rel (%p117) target = $region20
      $region19: #{tpu_custom_call.1} parent=5 // pred_region
        // Predicated region
        $region21: #{tpu_custom_call.1} parent=19 // pred_check
          %p120 = pneg %p43
        $region22: #{tpu_custom_call.1} parent=19 // pred_check_branch
          %122 = sbr.rel (%p120) target = $region24
        $region23: #{tpu_custom_call.1} parent=19 // pred_region
          %p123 = scmp.lt.s32.totalorder %s18, 1
          %s124 = scalar_select %p123, %s18, 1
          %s125 = smul.addr %s124, 54
          %s126 = smul.addr %s125, 4
          %s127 = scalar_lea.vmem %s0, %s126
        $region24: #{tpu_custom_call.1} parent=19 // pred_fallthru
          _
      $region20: #{tpu_custom_call.1} parent=5 // pred_fallthru
        _
      %p128 = scmp.le.s32.totalorder 1, %s11
      %p129 = scmp.lt.s32.totalorder %s11, 3
      %p130 = pnand %p128, %p129
      %p131 = pneg %p130
      // Predicated region
      $region25: #{tpu_custom_call.1} parent=5 // pred_check
        _
      $region26: #{tpu_custom_call.1} parent=5 // pred_check_branch
        %133 = sbr.rel (%p130) target = $region28
      $region27: #{tpu_custom_call.1} parent=5 // pred_region
        %s134 = ssub.s32 %s11, 1
        %p135 = scmp.lt.s32.totalorder %s20, 1
        %s136 = scalar_select %p135, %s20, 1
        %s137 = smul.addr %s136, 54
        %s138 = smul.addr %s137, 4
        %s139 = scalar_lea.vmem %s0, %s138
        %p140 = pneg %p49
        %p141 = pneg %p46
        %p142 = pneg %p70
        %p143 = pneg %p67
        %p144 = pneg %p98
        %p145 = pneg %p95
        %s146 = sand.u32 %s85, 1
        %s147 = scalar_lea.sflag [#allocation3], %s146
        %s148 = sand.u32 %s85, 1
        %s149 = smul.addr %s148, 256
        %s150 = scalar_lea.vmem [#allocation2], %s149
        %p151 = scmp.lt.s32.totalorder %s20, 1
        %s152 = scalar_select %p151, %s20, 1
        %s153 = smul.addr %s152, 54
        %s154 = smul.addr %s153, 4
        %s155 = scalar_lea.vmem %s0, %s154
        %s156 = smul.u32 16, %s21
        %s158 = smul.u32 %s21, 16
        %s159 = smul.u32 %s158, 3
        %s160 = smul.addr %s159, 4
        %s161 = scalar_lea.vmem %s155, %s160
        %v162 = vld [vmem:[%s161] sm:$0xf]
        %v163 = vld [vmem:[%s161 + $0x4] sm:$0xf]
        %v164 = vld [vmem:[%s161 + $0x8] sm:$0x1]
        %v165 = vld [vmem:[%s161 + $0xc] sm:$0xf]
        %v166 = vld [vmem:[%s161 + $0x10] sm:$0xf]
        %v167 = vld [vmem:[%s161 + $0x14] sm:$0x1]
        %v168 = vld [vmem:[%s161 + $0x18] sm:$0xf]
        %v169 = vld [vmem:[%s161 + $0x1c] sm:$0xf]
        %v170 = vld [vmem:[%s161 + $0x20] sm:$0x1]
        %v171 = vld [vmem:[%s161 + $0x24] sm:$0xf]
        %v172 = vld [vmem:[%s161 + $0x28] sm:$0xf]
        %v173 = vld [vmem:[%s161 + $0x2c] sm:$0x1]
        %v174 = vld [vmem:[%s161 + $0x30] sm:$0xf]
        %v175 = vld [vmem:[%s161 + $0x34] sm:$0xf]
        %v176 = vld [vmem:[%s161 + $0x38] sm:$0x1]
        %v177 = vld [vmem:[%s161 + $0x3c] sm:$0xf]
        %v178 = vld [vmem:[%s161 + $0x40] sm:$0xf]
        %v179 = vld [vmem:[%s161 + $0x44] sm:$0x1]
        %v180 = vld [vmem:[%s161 + $0x48] sm:$0xf]
        %v181 = vld [vmem:[%s161 + $0x4c] sm:$0xf]
        %v182 = vld [vmem:[%s161 + $0x50] sm:$0x1]
        %v183 = vld [vmem:[%s161 + $0x54] sm:$0xf]
        %v184 = vld [vmem:[%s161 + $0x58] sm:$0xf]
        %v185 = vld [vmem:[%s161 + $0x5c] sm:$0x1]
        %v186 = vld [vmem:[%s161 + $0x60] sm:$0xf]
        %v187 = vld [vmem:[%s161 + $0x64] sm:$0xf]
        %v188 = vld [vmem:[%s161 + $0x68] sm:$0x1]
        %v189 = vld [vmem:[%s161 + $0x6c] sm:$0xf]
        %v190 = vld [vmem:[%s161 + $0x70] sm:$0xf]
        %v191 = vld [vmem:[%s161 + $0x74] sm:$0x1]
        %v192 = vld [vmem:[%s161 + $0x78] sm:$0xf]
        %v193 = vld [vmem:[%s161 + $0x7c] sm:$0xf]
        %v194 = vld [vmem:[%s161 + $0x80] sm:$0x1]
        %v195 = vld [vmem:[%s161 + $0x84] sm:$0xf]
        %v196 = vld [vmem:[%s161 + $0x88] sm:$0xf]
        %v197 = vld [vmem:[%s161 + $0x8c] sm:$0x1]
        %v198 = vld [vmem:[%s161 + $0x90] sm:$0xf]
        %v199 = vld [vmem:[%s161 + $0x94] sm:$0xf]
        %v200 = vld [vmem:[%s161 + $0x98] sm:$0x1]
        %v201 = vld [vmem:[%s161 + $0x9c] sm:$0xf]
        %v202 = vld [vmem:[%s161 + $0xa0] sm:$0xf]
        %v203 = vld [vmem:[%s161 + $0xa4] sm:$0x1]
        %v204 = vld [vmem:[%s161 + $0xa8] sm:$0xf]
        %v205 = vld [vmem:[%s161 + $0xac] sm:$0xf]
        %v206 = vld [vmem:[%s161 + $0xb0] sm:$0x1]
        %v207 = vld [vmem:[%s161 + $0xb4] sm:$0xf]
        %v208 = vld [vmem:[%s161 + $0xb8] sm:$0xf]
        %v209 = vld [vmem:[%s161 + $0xbc] sm:$0x1]
        %s210 = sadd.s32 %s158, 1
        %s211 = smul.u32 %s210, 3
        %s212 = smul.addr %s211, 4
        %s213 = scalar_lea.vmem %s155, %s212
        %v214 = vld [vmem:[%s213] sm:$0xf]
        %v215 = vld [vmem:[%s213 + $0x4] sm:$0xf]
        %v216 = vld [vmem:[%s213 + $0x8] sm:$0x1]
        %v217 = vld [vmem:[%s213 + $0xc] sm:$0xf]
        %v218 = vld [vmem:[%s213 + $0x10] sm:$0xf]
        %v219 = vld [vmem:[%s213 + $0x14] sm:$0x1]
        %v220 = vld [vmem:[%s213 + $0x18] sm:$0xf]
        %v221 = vld [vmem:[%s213 + $0x1c] sm:$0xf]
        %v222 = vld [vmem:[%s213 + $0x20] sm:$0x1]
        %v223 = vld [vmem:[%s213 + $0x24] sm:$0xf]
        %v224 = vld [vmem:[%s213 + $0x28] sm:$0xf]
        %v225 = vld [vmem:[%s213 + $0x2c] sm:$0x1]
        %v226 = vld [vmem:[%s213 + $0x30] sm:$0xf]
        %v227 = vld [vmem:[%s213 + $0x34] sm:$0xf]
        %v228 = vld [vmem:[%s213 + $0x38] sm:$0x1]
        %v229 = vld [vmem:[%s213 + $0x3c] sm:$0xf]
        %v230 = vld [vmem:[%s213 + $0x40] sm:$0xf]
        %v231 = vld [vmem:[%s213 + $0x44] sm:$0x1]
        %v232 = vld [vmem:[%s213 + $0x48] sm:$0xf]
        %v233 = vld [vmem:[%s213 + $0x4c] sm:$0xf]
        %v234 = vld [vmem:[%s213 + $0x50] sm:$0x1]
        %v235 = vld [vmem:[%s213 + $0x54] sm:$0xf]
        %v236 = vld [vmem:[%s213 + $0x58] sm:$0xf]
        %v237 = vld [vmem:[%s213 + $0x5c] sm:$0x1]
        %v238 = vld [vmem:[%s213 + $0x60] sm:$0xf]
        %v239 = vld [vmem:[%s213 + $0x64] sm:$0xf]
        %v240 = vld [vmem:[%s213 + $0x68] sm:$0x1]
        %v241 = vld [vmem:[%s213 + $0x6c] sm:$0xf]
        %v242 = vld [vmem:[%s213 + $0x70] sm:$0xf]
        %v243 = vld [vmem:[%s213 + $0x74] sm:$0x1]
        %v244 = vld [vmem:[%s213 + $0x78] sm:$0xf]
        %v245 = vld [vmem:[%s213 + $0x7c] sm:$0xf]
        %v246 = vld [vmem:[%s213 + $0x80] sm:$0x1]
        %v247 = vld [vmem:[%s213 + $0x84] sm:$0xf]
        %v248 = vld [vmem:[%s213 + $0x88] sm:$0xf]
        %v249 = vld [vmem:[%s213 + $0x8c] sm:$0x1]
        %v250 = vld [vmem:[%s213 + $0x90] sm:$0xf]
        %v251 = vld [vmem:[%s213 + $0x94] sm:$0xf]
        %v252 = vld [vmem:[%s213 + $0x98] sm:$0x1]
        %v253 = vld [vmem:[%s213 + $0x9c] sm:$0xf]
        %v254 = vld [vmem:[%s213 + $0xa0] sm:$0xf]
        %v255 = vld [vmem:[%s213 + $0xa4] sm:$0x1]
        %v256 = vld [vmem:[%s213 + $0xa8] sm:$0xf]
        %v257 = vld [vmem:[%s213 + $0xac] sm:$0xf]
        %v258 = vld [vmem:[%s213 + $0xb0] sm:$0x1]
        %v259 = vld [vmem:[%s213 + $0xb4] sm:$0xf]
        %v260 = vld [vmem:[%s213 + $0xb8] sm:$0xf]
        %v261 = vld [vmem:[%s213 + $0xbc] sm:$0x1]
        %s262 = sadd.s32 %s158, 2
        %s263 = smul.u32 %s262, 3
        %s264 = smul.addr %s263, 4
        %s265 = scalar_lea.vmem %s155, %s264
        %v266 = vld [vmem:[%s265] sm:$0xf]
        %v267 = vld [vmem:[%s265 + $0x4] sm:$0xf]
        %v268 = vld [vmem:[%s265 + $0x8] sm:$0x1]
        %v269 = vld [vmem:[%s265 + $0xc] sm:$0xf]
        %v270 = vld [vmem:[%s265 + $0x10] sm:$0xf]
        %v271 = vld [vmem:[%s265 + $0x14] sm:$0x1]
        %v272 = vld [vmem:[%s265 + $0x18] sm:$0xf]
        %v273 = vld [vmem:[%s265 + $0x1c] sm:$0xf]
        %v274 = vld [vmem:[%s265 + $0x20] sm:$0x1]
        %v275 = vld [vmem:[%s265 + $0x24] sm:$0xf]
        %v276 = vld [vmem:[%s265 + $0x28] sm:$0xf]
        %v277 = vld [vmem:[%s265 + $0x2c] sm:$0x1]
        %v278 = vld [vmem:[%s265 + $0x30] sm:$0xf]
        %v279 = vld [vmem:[%s265 + $0x34] sm:$0xf]
        %v280 = vld [vmem:[%s265 + $0x38] sm:$0x1]
        %v281 = vld [vmem:[%s265 + $0x3c] sm:$0xf]
        %v282 = vld [vmem:[%s265 + $0x40] sm:$0xf]
        %v283 = vld [vmem:[%s265 + $0x44] sm:$0x1]
        %v284 = vld [vmem:[%s265 + $0x48] sm:$0xf]
        %v285 = vld [vmem:[%s265 + $0x4c] sm:$0xf]
        %v286 = vld [vmem:[%s265 + $0x50] sm:$0x1]
        %v287 = vld [vmem:[%s265 + $0x54] sm:$0xf]
        %v288 = vld [vmem:[%s265 + $0x58] sm:$0xf]
        %v289 = vld [vmem:[%s265 + $0x5c] sm:$0x1]
        %v290 = vld [vmem:[%s265 + $0x60] sm:$0xf]
        %v291 = vld [vmem:[%s265 + $0x64] sm:$0xf]
        %v292 = vld [vmem:[%s265 + $0x68] sm:$0x1]
        %v293 = vld [vmem:[%s265 + $0x6c] sm:$0xf]
        %v294 = vld [vmem:[%s265 + $0x70] sm:$0xf]
        %v295 = vld [vmem:[%s265 + $0x74] sm:$0x1]
        %v296 = vld [vmem:[%s265 + $0x78] sm:$0xf]
        %v297 = vld [vmem:[%s265 + $0x7c] sm:$0xf]
        %v298 = vld [vmem:[%s265 + $0x80] sm:$0x1]
        %v299 = vld [vmem:[%s265 + $0x84] sm:$0xf]
        %v300 = vld [vmem:[%s265 + $0x88] sm:$0xf]
        %v301 = vld [vmem:[%s265 + $0x8c] sm:$0x1]
        %v302 = vld [vmem:[%s265 + $0x90] sm:$0xf]
        %v303 = vld [vmem:[%s265 + $0x94] sm:$0xf]
        %v304 = vld [vmem:[%s265 + $0x98] sm:$0x1]
        %v305 = vld [vmem:[%s265 + $0x9c] sm:$0xf]
        %v306 = vld [vmem:[%s265 + $0xa0] sm:$0xf]
        %v307 = vld [vmem:[%s265 + $0xa4] sm:$0x1]
        %v308 = vld [vmem:[%s265 + $0xa8] sm:$0xf]
        %v309 = vld [vmem:[%s265 + $0xac] sm:$0xf]
        %v310 = vld [vmem:[%s265 + $0xb0] sm:$0x1]
        %v311 = vld [vmem:[%s265 + $0xb4] sm:$0xf]
        %v312 = vld [vmem:[%s265 + $0xb8] sm:$0xf]
        %v313 = vld [vmem:[%s265 + $0xbc] sm:$0x1]
        %v346 = vunpack.c.l.b16 %v162
        %v347 = vunpack.c.l.b16 %v163
        %v348 = vunpack.c.l.b16 %v165
        %v349 = vunpack.c.l.b16 %v166
        %v350 = vunpack.c.l.b16 %v168
        %v351 = vunpack.c.l.b16 %v169
        %v352 = vunpack.c.l.b16 %v171
        %v353 = vunpack.c.l.b16 %v172
        %v354 = vunpack.c.l.b16 %v174
        %v355 = vunpack.c.l.b16 %v175
        %v356 = vunpack.c.l.b16 %v177
        %v357 = vunpack.c.l.b16 %v178
        %v358 = vunpack.c.l.b16 %v180
        %v359 = vunpack.c.l.b16 %v181
        %v360 = vunpack.c.l.b16 %v183
        %v361 = vunpack.c.l.b16 %v184
        %v362 = vunpack.c.l.b16 %v186
        %v363 = vunpack.c.l.b16 %v187
        %v364 = vunpack.c.l.b16 %v189
        %v365 = vunpack.c.l.b16 %v190
        %v366 = vunpack.c.l.b16 %v192
        %v367 = vunpack.c.l.b16 %v193
        %v368 = vunpack.c.l.b16 %v195
        %v369 = vunpack.c.l.b16 %v196
        %v370 = vunpack.c.l.b16 %v198
        %v371 = vunpack.c.l.b16 %v199
        %v372 = vunpack.c.l.b16 %v201
        %v373 = vunpack.c.l.b16 %v202
        %v374 = vunpack.c.l.b16 %v204
        %v375 = vunpack.c.l.b16 %v205
        %v376 = vunpack.c.l.b16 %v207
        %v377 = vunpack.c.l.b16 %v208
        %v378 = vpack.c.b16 %v347, %v346
        %v379 = vpack.c.b16 %v349, %v348
        %v380 = vpack.c.b16 %v351, %v350
        %v381 = vpack.c.b16 %v353, %v352
        %v382 = vpack.c.b16 %v355, %v354
        %v383 = vpack.c.b16 %v357, %v356
        %v384 = vpack.c.b16 %v359, %v358
        %v385 = vpack.c.b16 %v361, %v360
        %v386 = vpack.c.b16 %v363, %v362
        %v387 = vpack.c.b16 %v365, %v364
        %v388 = vpack.c.b16 %v367, %v366
        %v389 = vpack.c.b16 %v369, %v368
        %v390 = vpack.c.b16 %v371, %v370
        %v391 = vpack.c.b16 %v373, %v372
        %v392 = vpack.c.b16 %v375, %v374
        %v393 = vpack.c.b16 %v377, %v376
        %v410 = vunpack.c.l.b16 %v164
        %v411 = vunpack.c.l.b16 %v167
        %v412 = vunpack.c.l.b16 %v170
        %v413 = vunpack.c.l.b16 %v173
        %v414 = vunpack.c.l.b16 %v176
        %v415 = vunpack.c.l.b16 %v179
        %v416 = vunpack.c.l.b16 %v182
        %v417 = vunpack.c.l.b16 %v185
        %v418 = vunpack.c.l.b16 %v188
        %v419 = vunpack.c.l.b16 %v191
        %v420 = vunpack.c.l.b16 %v194
        %v421 = vunpack.c.l.b16 %v197
        %v422 = vunpack.c.l.b16 %v200
        %v423 = vunpack.c.l.b16 %v203
        %v424 = vunpack.c.l.b16 %v206
        %v425 = vunpack.c.l.b16 %v209
        %v426 = vpack.c.b16 %v410, %v410
        %v427 = vpack.c.b16 %v411, %v411
        %v428 = vpack.c.b16 %v412, %v412
        %v429 = vpack.c.b16 %v413, %v413
        %v430 = vpack.c.b16 %v414, %v414
        %v431 = vpack.c.b16 %v415, %v415
        %v432 = vpack.c.b16 %v416, %v416
        %v433 = vpack.c.b16 %v417, %v417
        %v434 = vpack.c.b16 %v418, %v418
        %v435 = vpack.c.b16 %v419, %v419
        %v436 = vpack.c.b16 %v420, %v420
        %v437 = vpack.c.b16 %v421, %v421
        %v438 = vpack.c.b16 %v422, %v422
        %v439 = vpack.c.b16 %v423, %v423
        %v440 = vpack.c.b16 %v424, %v424
        %v441 = vpack.c.b16 %v425, %v425
        %vm442 = vsmask.f32 7424
        %v444 = vshrl.u32 %v378, 16
        %v446 = vshll.u32 %v378, 16
        %v448 = vrot.slane %v446, 1
        %v449 = vor.u32 %v444, %v448
        %v451 = vshll.u32 %v426, 16
        %v453 = vrot.slane %v451, 1
        %v454 = vsel %vm442, %v449, %v453
        %v456 = vshrl.u32 %v379, 16
        %v458 = vshll.u32 %v379, 16
        %v460 = vrot.slane %v458, 1
        %v461 = vor.u32 %v456, %v460
        %v463 = vshll.u32 %v427, 16
        %v465 = vrot.slane %v463, 1
        %v466 = vsel %vm442, %v461, %v465
        %v468 = vshrl.u32 %v380, 16
        %v470 = vshll.u32 %v380, 16
        %v472 = vrot.slane %v470, 1
        %v473 = vor.u32 %v468, %v472
        %v475 = vshll.u32 %v428, 16
        %v477 = vrot.slane %v475, 1
        %v478 = vsel %vm442, %v473, %v477
        %v480 = vshrl.u32 %v381, 16
        %v482 = vshll.u32 %v381, 16
        %v484 = vrot.slane %v482, 1
        %v485 = vor.u32 %v480, %v484
        %v487 = vshll.u32 %v429, 16
        %v489 = vrot.slane %v487, 1
        %v490 = vsel %vm442, %v485, %v489
        %v492 = vshrl.u32 %v382, 16
        %v494 = vshll.u32 %v382, 16
        %v496 = vrot.slane %v494, 1
        %v497 = vor.u32 %v492, %v496
        %v499 = vshll.u32 %v430, 16
        %v501 = vrot.slane %v499, 1
        %v502 = vsel %vm442, %v497, %v501
        %v504 = vshrl.u32 %v383, 16
        %v506 = vshll.u32 %v383, 16
        %v508 = vrot.slane %v506, 1
        %v509 = vor.u32 %v504, %v508
        %v511 = vshll.u32 %v431, 16
        %v513 = vrot.slane %v511, 1
        %v514 = vsel %vm442, %v509, %v513
        %v516 = vshrl.u32 %v384, 16
        %v518 = vshll.u32 %v384, 16
        %v520 = vrot.slane %v518, 1
        %v521 = vor.u32 %v516, %v520
        %v523 = vshll.u32 %v432, 16
        %v525 = vrot.slane %v523, 1
        %v526 = vsel %vm442, %v521, %v525
        %v528 = vshrl.u32 %v385, 16
        %v530 = vshll.u32 %v385, 16
        %v532 = vrot.slane %v530, 1
        %v533 = vor.u32 %v528, %v532
        %v535 = vshll.u32 %v433, 16
        %v537 = vrot.slane %v535, 1
        %v538 = vsel %vm442, %v533, %v537
        %v540 = vshrl.u32 %v386, 16
        %v542 = vshll.u32 %v386, 16
        %v544 = vrot.slane %v542, 1
        %v545 = vor.u32 %v540, %v544
        %v547 = vshll.u32 %v434, 16
        %v549 = vrot.slane %v547, 1
        %v550 = vsel %vm442, %v545, %v549
        %v552 = vshrl.u32 %v387, 16
        %v554 = vshll.u32 %v387, 16
        %v556 = vrot.slane %v554, 1
        %v557 = vor.u32 %v552, %v556
        %v559 = vshll.u32 %v435, 16
        %v561 = vrot.slane %v559, 1
        %v562 = vsel %vm442, %v557, %v561
        %v564 = vshrl.u32 %v388, 16
        %v566 = vshll.u32 %v388, 16
        %v568 = vrot.slane %v566, 1
        %v569 = vor.u32 %v564, %v568
        %v571 = vshll.u32 %v436, 16
        %v573 = vrot.slane %v571, 1
        %v574 = vsel %vm442, %v569, %v573
        %v576 = vshrl.u32 %v389, 16
        %v578 = vshll.u32 %v389, 16
        %v580 = vrot.slane %v578, 1
        %v581 = vor.u32 %v576, %v580
        %v583 = vshll.u32 %v437, 16
        %v585 = vrot.slane %v583, 1
        %v586 = vsel %vm442, %v581, %v585
        %v588 = vshrl.u32 %v390, 16
        %v590 = vshll.u32 %v390, 16
        %v592 = vrot.slane %v590, 1
        %v593 = vor.u32 %v588, %v592
        %v595 = vshll.u32 %v438, 16
        %v597 = vrot.slane %v595, 1
        %v598 = vsel %vm442, %v593, %v597
        %v600 = vshrl.u32 %v391, 16
        %v602 = vshll.u32 %v391, 16
        %v604 = vrot.slane %v602, 1
        %v605 = vor.u32 %v600, %v604
        %v607 = vshll.u32 %v439, 16
        %v609 = vrot.slane %v607, 1
        %v610 = vsel %vm442, %v605, %v609
        %v612 = vshrl.u32 %v392, 16
        %v614 = vshll.u32 %v392, 16
        %v616 = vrot.slane %v614, 1
        %v617 = vor.u32 %v612, %v616
        %v619 = vshll.u32 %v440, 16
        %v621 = vrot.slane %v619, 1
        %v622 = vsel %vm442, %v617, %v621
        %v624 = vshrl.u32 %v393, 16
        %v626 = vshll.u32 %v393, 16
        %v628 = vrot.slane %v626, 1
        %v629 = vor.u32 %v624, %v628
        %v631 = vshll.u32 %v441, 16
        %v633 = vrot.slane %v631, 1
        %v634 = vsel %vm442, %v629, %v633
        %635 = vrot.lane.b32.xlu0 %v454, 2
        %v636 = vpop.permute.xlu0 %635
        %637 = vrot.lane.b32.xlu0 %v466, 2
        %v638 = vpop.permute.xlu0 %637
        %639 = vrot.lane.b32.xlu0 %v478, 2
        %v640 = vpop.permute.xlu0 %639
        %641 = vrot.lane.b32.xlu0 %v490, 2
        %v642 = vpop.permute.xlu0 %641
        %643 = vrot.lane.b32.xlu0 %v502, 2
        %v644 = vpop.permute.xlu0 %643
        %645 = vrot.lane.b32.xlu0 %v514, 2
        %v646 = vpop.permute.xlu0 %645
        %647 = vrot.lane.b32.xlu0 %v526, 2
        %v648 = vpop.permute.xlu0 %647
        %649 = vrot.lane.b32.xlu0 %v538, 2
        %v650 = vpop.permute.xlu0 %649
        %651 = vrot.lane.b32.xlu0 %v550, 2
        %v652 = vpop.permute.xlu0 %651
        %653 = vrot.lane.b32.xlu0 %v562, 2
        %v654 = vpop.permute.xlu0 %653
        %655 = vrot.lane.b32.xlu0 %v574, 2
        %v656 = vpop.permute.xlu0 %655
        %657 = vrot.lane.b32.xlu0 %v586, 2
        %v658 = vpop.permute.xlu0 %657
        %659 = vrot.lane.b32.xlu0 %v598, 2
        %v660 = vpop.permute.xlu0 %659
        %661 = vrot.lane.b32.xlu0 %v610, 2
        %v662 = vpop.permute.xlu0 %661
        %663 = vrot.lane.b32.xlu0 %v622, 2
        %v664 = vpop.permute.xlu0 %663
        %665 = vrot.lane.b32.xlu0 %v634, 2
        %v666 = vpop.permute.xlu0 %665
        %vm667 = vcmask 1046528
        %v668 = vrot.slane %v378, 1
        %v669 = vrot.slane %v426, 1
        %v670 = vsel %vm667, %v668, %v669
        %v671 = vrot.slane %v379, 1
        %v672 = vrot.slane %v427, 1
        %v673 = vsel %vm667, %v671, %v672
        %v674 = vrot.slane %v380, 1
        %v675 = vrot.slane %v428, 1
        %v676 = vsel %vm667, %v674, %v675
        %v677 = vrot.slane %v381, 1
        %v678 = vrot.slane %v429, 1
        %v679 = vsel %vm667, %v677, %v678
        %v680 = vrot.slane %v382, 1
        %v681 = vrot.slane %v430, 1
        %v682 = vsel %vm667, %v680, %v681
        %v683 = vrot.slane %v383, 1
        %v684 = vrot.slane %v431, 1
        %v685 = vsel %vm667, %v683, %v684
        %v686 = vrot.slane %v384, 1
        %v687 = vrot.slane %v432, 1
        %v688 = vsel %vm667, %v686, %v687
        %v689 = vrot.slane %v385, 1
        %v690 = vrot.slane %v433, 1
        %v691 = vsel %vm667, %v689, %v690
        %v692 = vrot.slane %v386, 1
        %v693 = vrot.slane %v434, 1
        %v694 = vsel %vm667, %v692, %v693
        %v695 = vrot.slane %v387, 1
        %v696 = vrot.slane %v435, 1
        %v697 = vsel %vm667, %v695, %v696
        %v698 = vrot.slane %v388, 1
        %v699 = vrot.slane %v436, 1
        %v700 = vsel %vm667, %v698, %v699
        %v701 = vrot.slane %v389, 1
        %v702 = vrot.slane %v437, 1
        %v703 = vsel %vm667, %v701, %v702
        %v704 = vrot.slane %v390, 1
        %v705 = vrot.slane %v438, 1
        %v706 = vsel %vm667, %v704, %v705
        %v707 = vrot.slane %v391, 1
        %v708 = vrot.slane %v439, 1
        %v709 = vsel %vm667, %v707, %v708
        %v710 = vrot.slane %v392, 1
        %v711 = vrot.slane %v440, 1
        %v712 = vsel %vm667, %v710, %v711
        %v713 = vrot.slane %v393, 1
        %v714 = vrot.slane %v441, 1
        %v715 = vsel %vm667, %v713, %v714
        %716 = vrot.lane.b32.xlu0 %v670, 4
        %v717 = vpop.permute.xlu0 %716
        %718 = vrot.lane.b32.xlu0 %v673, 4
        %v719 = vpop.permute.xlu0 %718
        %720 = vrot.lane.b32.xlu0 %v676, 4
        %v721 = vpop.permute.xlu0 %720
        %722 = vrot.lane.b32.xlu0 %v679, 4
        %v723 = vpop.permute.xlu0 %722
        %724 = vrot.lane.b32.xlu0 %v682, 4
        %v725 = vpop.permute.xlu0 %724
        %726 = vrot.lane.b32.xlu0 %v685, 4
        %v727 = vpop.permute.xlu0 %726
        %728 = vrot.lane.b32.xlu0 %v688, 4
        %v729 = vpop.permute.xlu0 %728
        %730 = vrot.lane.b32.xlu0 %v691, 4
        %v731 = vpop.permute.xlu0 %730
        %732 = vrot.lane.b32.xlu0 %v694, 4
        %v733 = vpop.permute.xlu0 %732
        %734 = vrot.lane.b32.xlu0 %v697, 4
        %v735 = vpop.permute.xlu0 %734
        %736 = vrot.lane.b32.xlu0 %v700, 4
        %v737 = vpop.permute.xlu0 %736
        %738 = vrot.lane.b32.xlu0 %v703, 4
        %v739 = vpop.permute.xlu0 %738
        %740 = vrot.lane.b32.xlu0 %v706, 4
        %v741 = vpop.permute.xlu0 %740
        %742 = vrot.lane.b32.xlu0 %v709, 4
        %v743 = vpop.permute.xlu0 %742
        %744 = vrot.lane.b32.xlu0 %v712, 4
        %v745 = vpop.permute.xlu0 %744
        %746 = vrot.lane.b32.xlu0 %v715, 4
        %v747 = vpop.permute.xlu0 %746
        %v780 = vunpack.c.l.b16 %v214
        %v781 = vunpack.c.l.b16 %v215
        %v782 = vunpack.c.l.b16 %v217
        %v783 = vunpack.c.l.b16 %v218
        %v784 = vunpack.c.l.b16 %v220
        %v785 = vunpack.c.l.b16 %v221
        %v786 = vunpack.c.l.b16 %v223
        %v787 = vunpack.c.l.b16 %v224
        %v788 = vunpack.c.l.b16 %v226
        %v789 = vunpack.c.l.b16 %v227
        %v790 = vunpack.c.l.b16 %v229
        %v791 = vunpack.c.l.b16 %v230
        %v792 = vunpack.c.l.b16 %v232
        %v793 = vunpack.c.l.b16 %v233
        %v794 = vunpack.c.l.b16 %v235
        %v795 = vunpack.c.l.b16 %v236
        %v796 = vunpack.c.l.b16 %v238
        %v797 = vunpack.c.l.b16 %v239
        %v798 = vunpack.c.l.b16 %v241
        %v799 = vunpack.c.l.b16 %v242
        %v800 = vunpack.c.l.b16 %v244
        %v801 = vunpack.c.l.b16 %v245
        %v802 = vunpack.c.l.b16 %v247
        %v803 = vunpack.c.l.b16 %v248
        %v804 = vunpack.c.l.b16 %v250
        %v805 = vunpack.c.l.b16 %v251
        %v806 = vunpack.c.l.b16 %v253
        %v807 = vunpack.c.l.b16 %v254
        %v808 = vunpack.c.l.b16 %v256
        %v809 = vunpack.c.l.b16 %v257
        %v810 = vunpack.c.l.b16 %v259
        %v811 = vunpack.c.l.b16 %v260
        %v812 = vpack.c.b16 %v781, %v780
        %v813 = vpack.c.b16 %v783, %v782
        %v814 = vpack.c.b16 %v785, %v784
        %v815 = vpack.c.b16 %v787, %v786
        %v816 = vpack.c.b16 %v789, %v788
        %v817 = vpack.c.b16 %v791, %v790
        %v818 = vpack.c.b16 %v793, %v792
        %v819 = vpack.c.b16 %v795, %v794
        %v820 = vpack.c.b16 %v797, %v796
        %v821 = vpack.c.b16 %v799, %v798
        %v822 = vpack.c.b16 %v801, %v800
        %v823 = vpack.c.b16 %v803, %v802
        %v824 = vpack.c.b16 %v805, %v804
        %v825 = vpack.c.b16 %v807, %v806
        %v826 = vpack.c.b16 %v809, %v808
        %v827 = vpack.c.b16 %v811, %v810
        %828 = vrot.lane.b32.xlu0 %v812, 6
        %v829 = vpop.permute.xlu0 %828
        %830 = vrot.lane.b32.xlu0 %v813, 6
        %v831 = vpop.permute.xlu0 %830
        %832 = vrot.lane.b32.xlu0 %v814, 6
        %v833 = vpop.permute.xlu0 %832
        %834 = vrot.lane.b32.xlu0 %v815, 6
        %v835 = vpop.permute.xlu0 %834
        %836 = vrot.lane.b32.xlu0 %v816, 6
        %v837 = vpop.permute.xlu0 %836
        %838 = vrot.lane.b32.xlu0 %v817, 6
        %v839 = vpop.permute.xlu0 %838
        %840 = vrot.lane.b32.xlu0 %v818, 6
        %v841 = vpop.permute.xlu0 %840
        %842 = vrot.lane.b32.xlu0 %v819, 6
        %v843 = vpop.permute.xlu0 %842
        %844 = vrot.lane.b32.xlu0 %v820, 6
        %v845 = vpop.permute.xlu0 %844
        %846 = vrot.lane.b32.xlu0 %v821, 6
        %v847 = vpop.permute.xlu0 %846
        %848 = vrot.lane.b32.xlu0 %v822, 6
        %v849 = vpop.permute.xlu0 %848
        %850 = vrot.lane.b32.xlu0 %v823, 6
        %v851 = vpop.permute.xlu0 %850
        %852 = vrot.lane.b32.xlu0 %v824, 6
        %v853 = vpop.permute.xlu0 %852
        %854 = vrot.lane.b32.xlu0 %v825, 6
        %v855 = vpop.permute.xlu0 %854
        %856 = vrot.lane.b32.xlu0 %v826, 6
        %v857 = vpop.permute.xlu0 %856
        %858 = vrot.lane.b32.xlu0 %v827, 6
        %v859 = vpop.permute.xlu0 %858
        %v876 = vunpack.c.l.b16 %v216
        %v877 = vunpack.c.l.b16 %v219
        %v878 = vunpack.c.l.b16 %v222
        %v879 = vunpack.c.l.b16 %v225
        %v880 = vunpack.c.l.b16 %v228
        %v881 = vunpack.c.l.b16 %v231
        %v882 = vunpack.c.l.b16 %v234
        %v883 = vunpack.c.l.b16 %v237
        %v884 = vunpack.c.l.b16 %v240
        %v885 = vunpack.c.l.b16 %v243
        %v886 = vunpack.c.l.b16 %v246
        %v887 = vunpack.c.l.b16 %v249
        %v888 = vunpack.c.l.b16 %v252
        %v889 = vunpack.c.l.b16 %v255
        %v890 = vunpack.c.l.b16 %v258
        %v891 = vunpack.c.l.b16 %v261
        %v892 = vpack.c.b16 %v876, %v876
        %v893 = vpack.c.b16 %v877, %v877
        %v894 = vpack.c.b16 %v878, %v878
        %v895 = vpack.c.b16 %v879, %v879
        %v896 = vpack.c.b16 %v880, %v880
        %v897 = vpack.c.b16 %v881, %v881
        %v898 = vpack.c.b16 %v882, %v882
        %v899 = vpack.c.b16 %v883, %v883
        %v900 = vpack.c.b16 %v884, %v884
        %v901 = vpack.c.b16 %v885, %v885
        %v902 = vpack.c.b16 %v886, %v886
        %v903 = vpack.c.b16 %v887, %v887
        %v904 = vpack.c.b16 %v888, %v888
        %v905 = vpack.c.b16 %v889, %v889
        %v906 = vpack.c.b16 %v890, %v890
        %v907 = vpack.c.b16 %v891, %v891
        %v909 = vshrl.u32 %v812, 16
        %v911 = vshll.u32 %v812, 16
        %v913 = vrot.slane %v911, 1
        %v914 = vor.u32 %v909, %v913
        %v916 = vshll.u32 %v892, 16
        %v918 = vrot.slane %v916, 1
        %v919 = vsel %vm442, %v914, %v918
        %v921 = vshrl.u32 %v813, 16
        %v923 = vshll.u32 %v813, 16
        %v925 = vrot.slane %v923, 1
        %v926 = vor.u32 %v921, %v925
        %v928 = vshll.u32 %v893, 16
        %v930 = vrot.slane %v928, 1
        %v931 = vsel %vm442, %v926, %v930
        %v933 = vshrl.u32 %v814, 16
        %v935 = vshll.u32 %v814, 16
        %v937 = vrot.slane %v935, 1
        %v938 = vor.u32 %v933, %v937
        %v940 = vshll.u32 %v894, 16
        %v942 = vrot.slane %v940, 1
        %v943 = vsel %vm442, %v938, %v942
        %v945 = vshrl.u32 %v815, 16
        %v947 = vshll.u32 %v815, 16
        %v949 = vrot.slane %v947, 1
        %v950 = vor.u32 %v945, %v949
        %v952 = vshll.u32 %v895, 16
        %v954 = vrot.slane %v952, 1
        %v955 = vsel %vm442, %v950, %v954
        %v957 = vshrl.u32 %v816, 16
        %v959 = vshll.u32 %v816, 16
        %v961 = vrot.slane %v959, 1
        %v962 = vor.u32 %v957, %v961
        %v964 = vshll.u32 %v896, 16
        %v966 = vrot.slane %v964, 1
        %v967 = vsel %vm442, %v962, %v966
        %v969 = vshrl.u32 %v817, 16
        %v971 = vshll.u32 %v817, 16
        %v973 = vrot.slane %v971, 1
        %v974 = vor.u32 %v969, %v973
        %v976 = vshll.u32 %v897, 16
        %v978 = vrot.slane %v976, 1
        %v979 = vsel %vm442, %v974, %v978
        %v981 = vshrl.u32 %v818, 16
        %v983 = vshll.u32 %v818, 16
        %v985 = vrot.slane %v983, 1
        %v986 = vor.u32 %v981, %v985
        %v988 = vshll.u32 %v898, 16
        %v990 = vrot.slane %v988, 1
        %v991 = vsel %vm442, %v986, %v990
        %v993 = vshrl.u32 %v819, 16
        %v995 = vshll.u32 %v819, 16
        %v997 = vrot.slane %v995, 1
        %v998 = vor.u32 %v993, %v997
        %v1000 = vshll.u32 %v899, 16
        %v1002 = vrot.slane %v1000, 1
        %v1003 = vsel %vm442, %v998, %v1002
        %v1005 = vshrl.u32 %v820, 16
        %v1007 = vshll.u32 %v820, 16
        %v1009 = vrot.slane %v1007, 1
        %v1010 = vor.u32 %v1005, %v1009
        %v1012 = vshll.u32 %v900, 16
        %v1014 = vrot.slane %v1012, 1
        %v1015 = vsel %vm442, %v1010, %v1014
        %v1017 = vshrl.u32 %v821, 16
        %v1019 = vshll.u32 %v821, 16
        %v1021 = vrot.slane %v1019, 1
        %v1022 = vor.u32 %v1017, %v1021
        %v1024 = vshll.u32 %v901, 16
        %v1026 = vrot.slane %v1024, 1
        %v1027 = vsel %vm442, %v1022, %v1026
        %v1029 = vshrl.u32 %v822, 16
        %v1031 = vshll.u32 %v822, 16
        %v1033 = vrot.slane %v1031, 1
        %v1034 = vor.u32 %v1029, %v1033
        %v1036 = vshll.u32 %v902, 16
        %v1038 = vrot.slane %v1036, 1
        %v1039 = vsel %vm442, %v1034, %v1038
        %v1041 = vshrl.u32 %v823, 16
        %v1043 = vshll.u32 %v823, 16
        %v1045 = vrot.slane %v1043, 1
        %v1046 = vor.u32 %v1041, %v1045
        %v1048 = vshll.u32 %v903, 16
        %v1050 = vrot.slane %v1048, 1
        %v1051 = vsel %vm442, %v1046, %v1050
        %v1053 = vshrl.u32 %v824, 16
        %v1055 = vshll.u32 %v824, 16
        %v1057 = vrot.slane %v1055, 1
        %v1058 = vor.u32 %v1053, %v1057
        %v1060 = vshll.u32 %v904, 16
        %v1062 = vrot.slane %v1060, 1
        %v1063 = vsel %vm442, %v1058, %v1062
        %v1065 = vshrl.u32 %v825, 16
        %v1067 = vshll.u32 %v825, 16
        %v1069 = vrot.slane %v1067, 1
        %v1070 = vor.u32 %v1065, %v1069
        %v1072 = vshll.u32 %v905, 16
        %v1074 = vrot.slane %v1072, 1
        %v1075 = vsel %vm442, %v1070, %v1074
        %v1077 = vshrl.u32 %v826, 16
        %v1079 = vshll.u32 %v826, 16
        %v1081 = vrot.slane %v1079, 1
        %v1082 = vor.u32 %v1077, %v1081
        %v1084 = vshll.u32 %v906, 16
        %v1086 = vrot.slane %v1084, 1
        %v1087 = vsel %vm442, %v1082, %v1086
        %v1089 = vshrl.u32 %v827, 16
        %v1091 = vshll.u32 %v827, 16
        %v1093 = vrot.slane %v1091, 1
        %v1094 = vor.u32 %v1089, %v1093
        %v1096 = vshll.u32 %v907, 16
        %v1098 = vrot.slane %v1096, 1
        %v1099 = vsel %vm442, %v1094, %v1098
        %1100 = vrot.lane.b32.xlu0 %v919, 8
        %v1101 = vpop.permute.xlu0 %1100
        %1102 = vrot.lane.b32.xlu0 %v931, 8
        %v1103 = vpop.permute.xlu0 %1102
        %1104 = vrot.lane.b32.xlu0 %v943, 8
        %v1105 = vpop.permute.xlu0 %1104
        %1106 = vrot.lane.b32.xlu0 %v955, 8
        %v1107 = vpop.permute.xlu0 %1106
        %1108 = vrot.lane.b32.xlu0 %v967, 8
        %v1109 = vpop.permute.xlu0 %1108
        %1110 = vrot.lane.b32.xlu0 %v979, 8
        %v1111 = vpop.permute.xlu0 %1110
        %1112 = vrot.lane.b32.xlu0 %v991, 8
        %v1113 = vpop.permute.xlu0 %1112
        %1114 = vrot.lane.b32.xlu0 %v1003, 8
        %v1115 = vpop.permute.xlu0 %1114
        %1116 = vrot.lane.b32.xlu0 %v1015, 8
        %v1117 = vpop.permute.xlu0 %1116
        %1118 = vrot.lane.b32.xlu0 %v1027, 8
        %v1119 = vpop.permute.xlu0 %1118
        %1120 = vrot.lane.b32.xlu0 %v1039, 8
        %v1121 = vpop.permute.xlu0 %1120
        %1122 = vrot.lane.b32.xlu0 %v1051, 8
        %v1123 = vpop.permute.xlu0 %1122
        %1124 = vrot.lane.b32.xlu0 %v1063, 8
        %v1125 = vpop.permute.xlu0 %1124
        %1126 = vrot.lane.b32.xlu0 %v1075, 8
        %v1127 = vpop.permute.xlu0 %1126
        %1128 = vrot.lane.b32.xlu0 %v1087, 8
        %v1129 = vpop.permute.xlu0 %1128
        %1130 = vrot.lane.b32.xlu0 %v1099, 8
        %v1131 = vpop.permute.xlu0 %1130
        %v1132 = vrot.slane %v812, 1
        %v1133 = vrot.slane %v892, 1
        %v1134 = vsel %vm667, %v1132, %v1133
        %v1135 = vrot.slane %v813, 1
        %v1136 = vrot.slane %v893, 1
        %v1137 = vsel %vm667, %v1135, %v1136
        %v1138 = vrot.slane %v814, 1
        %v1139 = vrot.slane %v894, 1
        %v1140 = vsel %vm667, %v1138, %v1139
        %v1141 = vrot.slane %v815, 1
        %v1142 = vrot.slane %v895, 1
        %v1143 = vsel %vm667, %v1141, %v1142
        %v1144 = vrot.slane %v816, 1
        %v1145 = vrot.slane %v896, 1
        %v1146 = vsel %vm667, %v1144, %v1145
        %v1147 = vrot.slane %v817, 1
        %v1148 = vrot.slane %v897, 1
        %v1149 = vsel %vm667, %v1147, %v1148
        %v1150 = vrot.slane %v818, 1
        %v1151 = vrot.slane %v898, 1
        %v1152 = vsel %vm667, %v1150, %v1151
        %v1153 = vrot.slane %v819, 1
        %v1154 = vrot.slane %v899, 1
        %v1155 = vsel %vm667, %v1153, %v1154
        %v1156 = vrot.slane %v820, 1
        %v1157 = vrot.slane %v900, 1
        %v1158 = vsel %vm667, %v1156, %v1157
        %v1159 = vrot.slane %v821, 1
        %v1160 = vrot.slane %v901, 1
        %v1161 = vsel %vm667, %v1159, %v1160
        %v1162 = vrot.slane %v822, 1
        %v1163 = vrot.slane %v902, 1
        %v1164 = vsel %vm667, %v1162, %v1163
        %v1165 = vrot.slane %v823, 1
        %v1166 = vrot.slane %v903, 1
        %v1167 = vsel %vm667, %v1165, %v1166
        %v1168 = vrot.slane %v824, 1
        %v1169 = vrot.slane %v904, 1
        %v1170 = vsel %vm667, %v1168, %v1169
        %v1171 = vrot.slane %v825, 1
        %v1172 = vrot.slane %v905, 1
        %v1173 = vsel %vm667, %v1171, %v1172
        %v1174 = vrot.slane %v826, 1
        %v1175 = vrot.slane %v906, 1
        %v1176 = vsel %vm667, %v1174, %v1175
        %v1177 = vrot.slane %v827, 1
        %v1178 = vrot.slane %v907, 1
        %v1179 = vsel %vm667, %v1177, %v1178
        %1180 = vrot.lane.b32.xlu0 %v1134, 10
        %v1181 = vpop.permute.xlu0 %1180
        %1182 = vrot.lane.b32.xlu0 %v1137, 10
        %v1183 = vpop.permute.xlu0 %1182
        %1184 = vrot.lane.b32.xlu0 %v1140, 10
        %v1185 = vpop.permute.xlu0 %1184
        %1186 = vrot.lane.b32.xlu0 %v1143, 10
        %v1187 = vpop.permute.xlu0 %1186
        %1188 = vrot.lane.b32.xlu0 %v1146, 10
        %v1189 = vpop.permute.xlu0 %1188
        %1190 = vrot.lane.b32.xlu0 %v1149, 10
        %v1191 = vpop.permute.xlu0 %1190
        %1192 = vrot.lane.b32.xlu0 %v1152, 10
        %v1193 = vpop.permute.xlu0 %1192
        %1194 = vrot.lane.b32.xlu0 %v1155, 10
        %v1195 = vpop.permute.xlu0 %1194
        %1196 = vrot.lane.b32.xlu0 %v1158, 10
        %v1197 = vpop.permute.xlu0 %1196
        %1198 = vrot.lane.b32.xlu0 %v1161, 10
        %v1199 = vpop.permute.xlu0 %1198
        %1200 = vrot.lane.b32.xlu0 %v1164, 10
        %v1201 = vpop.permute.xlu0 %1200
        %1202 = vrot.lane.b32.xlu0 %v1167, 10
        %v1203 = vpop.permute.xlu0 %1202
        %1204 = vrot.lane.b32.xlu0 %v1170, 10
        %v1205 = vpop.permute.xlu0 %1204
        %1206 = vrot.lane.b32.xlu0 %v1173, 10
        %v1207 = vpop.permute.xlu0 %1206
        %1208 = vrot.lane.b32.xlu0 %v1176, 10
        %v1209 = vpop.permute.xlu0 %1208
        %1210 = vrot.lane.b32.xlu0 %v1179, 10
        %v1211 = vpop.permute.xlu0 %1210
        %v1244 = vunpack.c.l.b16 %v266
        %v1245 = vunpack.c.l.b16 %v267
        %v1246 = vunpack.c.l.b16 %v269
        %v1247 = vunpack.c.l.b16 %v270
        %v1248 = vunpack.c.l.b16 %v272
        %v1249 = vunpack.c.l.b16 %v273
        %v1250 = vunpack.c.l.b16 %v275
        %v1251 = vunpack.c.l.b16 %v276
        %v1252 = vunpack.c.l.b16 %v278
        %v1253 = vunpack.c.l.b16 %v279
        %v1254 = vunpack.c.l.b16 %v281
        %v1255 = vunpack.c.l.b16 %v282
        %v1256 = vunpack.c.l.b16 %v284
        %v1257 = vunpack.c.l.b16 %v285
        %v1258 = vunpack.c.l.b16 %v287
        %v1259 = vunpack.c.l.b16 %v288
        %v1260 = vunpack.c.l.b16 %v290
        %v1261 = vunpack.c.l.b16 %v291
        %v1262 = vunpack.c.l.b16 %v293
        %v1263 = vunpack.c.l.b16 %v294
        %v1264 = vunpack.c.l.b16 %v296
        %v1265 = vunpack.c.l.b16 %v297
        %v1266 = vunpack.c.l.b16 %v299
        %v1267 = vunpack.c.l.b16 %v300
        %v1268 = vunpack.c.l.b16 %v302
        %v1269 = vunpack.c.l.b16 %v303
        %v1270 = vunpack.c.l.b16 %v305
        %v1271 = vunpack.c.l.b16 %v306
        %v1272 = vunpack.c.l.b16 %v308
        %v1273 = vunpack.c.l.b16 %v309
        %v1274 = vunpack.c.l.b16 %v311
        %v1275 = vunpack.c.l.b16 %v312
        %v1276 = vpack.c.b16 %v1245, %v1244
        %v1277 = vpack.c.b16 %v1247, %v1246
        %v1278 = vpack.c.b16 %v1249, %v1248
        %v1279 = vpack.c.b16 %v1251, %v1250
        %v1280 = vpack.c.b16 %v1253, %v1252
        %v1281 = vpack.c.b16 %v1255, %v1254
        %v1282 = vpack.c.b16 %v1257, %v1256
        %v1283 = vpack.c.b16 %v1259, %v1258
        %v1284 = vpack.c.b16 %v1261, %v1260
        %v1285 = vpack.c.b16 %v1263, %v1262
        %v1286 = vpack.c.b16 %v1265, %v1264
        %v1287 = vpack.c.b16 %v1267, %v1266
        %v1288 = vpack.c.b16 %v1269, %v1268
        %v1289 = vpack.c.b16 %v1271, %v1270
        %v1290 = vpack.c.b16 %v1273, %v1272
        %v1291 = vpack.c.b16 %v1275, %v1274
        %1292 = vrot.lane.b32.xlu0 %v1276, 12
        %v1293 = vpop.permute.xlu0 %1292
        %1294 = vrot.lane.b32.xlu0 %v1277, 12
        %v1295 = vpop.permute.xlu0 %1294
        %1296 = vrot.lane.b32.xlu0 %v1278, 12
        %v1297 = vpop.permute.xlu0 %1296
        %1298 = vrot.lane.b32.xlu0 %v1279, 12
        %v1299 = vpop.permute.xlu0 %1298
        %1300 = vrot.lane.b32.xlu0 %v1280, 12
        %v1301 = vpop.permute.xlu0 %1300
        %1302 = vrot.lane.b32.xlu0 %v1281, 12
        %v1303 = vpop.permute.xlu0 %1302
        %1304 = vrot.lane.b32.xlu0 %v1282, 12
        %v1305 = vpop.permute.xlu0 %1304
        %1306 = vrot.lane.b32.xlu0 %v1283, 12
        %v1307 = vpop.permute.xlu0 %1306
        %1308 = vrot.lane.b32.xlu0 %v1284, 12
        %v1309 = vpop.permute.xlu0 %1308
        %1310 = vrot.lane.b32.xlu0 %v1285, 12
        %v1311 = vpop.permute.xlu0 %1310
        %1312 = vrot.lane.b32.xlu0 %v1286, 12
        %v1313 = vpop.permute.xlu0 %1312
        %1314 = vrot.lane.b32.xlu0 %v1287, 12
        %v1315 = vpop.permute.xlu0 %1314
        %1316 = vrot.lane.b32.xlu0 %v1288, 12
        %v1317 = vpop.permute.xlu0 %1316
        %1318 = vrot.lane.b32.xlu0 %v1289, 12
        %v1319 = vpop.permute.xlu0 %1318
        %1320 = vrot.lane.b32.xlu0 %v1290, 12
        %v1321 = vpop.permute.xlu0 %1320
        %1322 = vrot.lane.b32.xlu0 %v1291, 12
        %v1323 = vpop.permute.xlu0 %1322
        %v1340 = vunpack.c.l.b16 %v268
        %v1341 = vunpack.c.l.b16 %v271
        %v1342 = vunpack.c.l.b16 %v274
        %v1343 = vunpack.c.l.b16 %v277
        %v1344 = vunpack.c.l.b16 %v280
        %v1345 = vunpack.c.l.b16 %v283
        %v1346 = vunpack.c.l.b16 %v286
        %v1347 = vunpack.c.l.b16 %v289
        %v1348 = vunpack.c.l.b16 %v292
        %v1349 = vunpack.c.l.b16 %v295
        %v1350 = vunpack.c.l.b16 %v298
        %v1351 = vunpack.c.l.b16 %v301
        %v1352 = vunpack.c.l.b16 %v304
        %v1353 = vunpack.c.l.b16 %v307
        %v1354 = vunpack.c.l.b16 %v310
        %v1355 = vunpack.c.l.b16 %v313
        %v1356 = vpack.c.b16 %v1340, %v1340
        %v1357 = vpack.c.b16 %v1341, %v1341
        %v1358 = vpack.c.b16 %v1342, %v1342
        %v1359 = vpack.c.b16 %v1343, %v1343
        %v1360 = vpack.c.b16 %v1344, %v1344
        %v1361 = vpack.c.b16 %v1345, %v1345
        %v1362 = vpack.c.b16 %v1346, %v1346
        %v1363 = vpack.c.b16 %v1347, %v1347
        %v1364 = vpack.c.b16 %v1348, %v1348
        %v1365 = vpack.c.b16 %v1349, %v1349
        %v1366 = vpack.c.b16 %v1350, %v1350
        %v1367 = vpack.c.b16 %v1351, %v1351
        %v1368 = vpack.c.b16 %v1352, %v1352
        %v1369 = vpack.c.b16 %v1353, %v1353
        %v1370 = vpack.c.b16 %v1354, %v1354
        %v1371 = vpack.c.b16 %v1355, %v1355
        %v1373 = vshrl.u32 %v1276, 16
        %v1375 = vshll.u32 %v1276, 16
        %v1377 = vrot.slane %v1375, 1
        %v1378 = vor.u32 %v1373, %v1377
        %v1380 = vshll.u32 %v1356, 16
        %v1382 = vrot.slane %v1380, 1
        %v1383 = vsel %vm442, %v1378, %v1382
        %v1385 = vshrl.u32 %v1277, 16
        %v1387 = vshll.u32 %v1277, 16
        %v1389 = vrot.slane %v1387, 1
        %v1390 = vor.u32 %v1385, %v1389
        %v1392 = vshll.u32 %v1357, 16
        %v1394 = vrot.slane %v1392, 1
        %v1395 = vsel %vm442, %v1390, %v1394
        %v1397 = vshrl.u32 %v1278, 16
        %v1399 = vshll.u32 %v1278, 16
        %v1401 = vrot.slane %v1399, 1
        %v1402 = vor.u32 %v1397, %v1401
        %v1404 = vshll.u32 %v1358, 16
        %v1406 = vrot.slane %v1404, 1
        %v1407 = vsel %vm442, %v1402, %v1406
        %v1409 = vshrl.u32 %v1279, 16
        %v1411 = vshll.u32 %v1279, 16
        %v1413 = vrot.slane %v1411, 1
        %v1414 = vor.u32 %v1409, %v1413
        %v1416 = vshll.u32 %v1359, 16
        %v1418 = vrot.slane %v1416, 1
        %v1419 = vsel %vm442, %v1414, %v1418
        %v1421 = vshrl.u32 %v1280, 16
        %v1423 = vshll.u32 %v1280, 16
        %v1425 = vrot.slane %v1423, 1
        %v1426 = vor.u32 %v1421, %v1425
        %v1428 = vshll.u32 %v1360, 16
        %v1430 = vrot.slane %v1428, 1
        %v1431 = vsel %vm442, %v1426, %v1430
        %v1433 = vshrl.u32 %v1281, 16
        %v1435 = vshll.u32 %v1281, 16
        %v1437 = vrot.slane %v1435, 1
        %v1438 = vor.u32 %v1433, %v1437
        %v1440 = vshll.u32 %v1361, 16
        %v1442 = vrot.slane %v1440, 1
        %v1443 = vsel %vm442, %v1438, %v1442
        %v1445 = vshrl.u32 %v1282, 16
        %v1447 = vshll.u32 %v1282, 16
        %v1449 = vrot.slane %v1447, 1
        %v1450 = vor.u32 %v1445, %v1449
        %v1452 = vshll.u32 %v1362, 16
        %v1454 = vrot.slane %v1452, 1
        %v1455 = vsel %vm442, %v1450, %v1454
        %v1457 = vshrl.u32 %v1283, 16
        %v1459 = vshll.u32 %v1283, 16
        %v1461 = vrot.slane %v1459, 1
        %v1462 = vor.u32 %v1457, %v1461
        %v1464 = vshll.u32 %v1363, 16
        %v1466 = vrot.slane %v1464, 1
        %v1467 = vsel %vm442, %v1462, %v1466
        %v1469 = vshrl.u32 %v1284, 16
        %v1471 = vshll.u32 %v1284, 16
        %v1473 = vrot.slane %v1471, 1
        %v1474 = vor.u32 %v1469, %v1473
        %v1476 = vshll.u32 %v1364, 16
        %v1478 = vrot.slane %v1476, 1
        %v1479 = vsel %vm442, %v1474, %v1478
        %v1481 = vshrl.u32 %v1285, 16
        %v1483 = vshll.u32 %v1285, 16
        %v1485 = vrot.slane %v1483, 1
        %v1486 = vor.u32 %v1481, %v1485
        %v1488 = vshll.u32 %v1365, 16
        %v1490 = vrot.slane %v1488, 1
        %v1491 = vsel %vm442, %v1486, %v1490
        %v1493 = vshrl.u32 %v1286, 16
        %v1495 = vshll.u32 %v1286, 16
        %v1497 = vrot.slane %v1495, 1
        %v1498 = vor.u32 %v1493, %v1497
        %v1500 = vshll.u32 %v1366, 16
        %v1502 = vrot.slane %v1500, 1
        %v1503 = vsel %vm442, %v1498, %v1502
        %v1505 = vshrl.u32 %v1287, 16
        %v1507 = vshll.u32 %v1287, 16
        %v1509 = vrot.slane %v1507, 1
        %v1510 = vor.u32 %v1505, %v1509
        %v1512 = vshll.u32 %v1367, 16
        %v1514 = vrot.slane %v1512, 1
        %v1515 = vsel %vm442, %v1510, %v1514
        %v1517 = vshrl.u32 %v1288, 16
        %v1519 = vshll.u32 %v1288, 16
        %v1521 = vrot.slane %v1519, 1
        %v1522 = vor.u32 %v1517, %v1521
        %v1524 = vshll.u32 %v1368, 16
        %v1526 = vrot.slane %v1524, 1
        %v1527 = vsel %vm442, %v1522, %v1526
        %v1529 = vshrl.u32 %v1289, 16
        %v1531 = vshll.u32 %v1289, 16
        %v1533 = vrot.slane %v1531, 1
        %v1534 = vor.u32 %v1529, %v1533
        %v1536 = vshll.u32 %v1369, 16
        %v1538 = vrot.slane %v1536, 1
        %v1539 = vsel %vm442, %v1534, %v1538
        %v1541 = vshrl.u32 %v1290, 16
        %v1543 = vshll.u32 %v1290, 16
        %v1545 = vrot.slane %v1543, 1
        %v1546 = vor.u32 %v1541, %v1545
        %v1548 = vshll.u32 %v1370, 16
        %v1550 = vrot.slane %v1548, 1
        %v1551 = vsel %vm442, %v1546, %v1550
        %v1553 = vshrl.u32 %v1291, 16
        %v1555 = vshll.u32 %v1291, 16
        %v1557 = vrot.slane %v1555, 1
        %v1558 = vor.u32 %v1553, %v1557
        %v1560 = vshll.u32 %v1371, 16
        %v1562 = vrot.slane %v1560, 1
        %v1563 = vsel %vm442, %v1558, %v1562
        %1564 = vrot.lane.b32.xlu0 %v1383, 14
        %v1565 = vpop.permute.xlu0 %1564
        %1566 = vrot.lane.b32.xlu0 %v1395, 14
        %v1567 = vpop.permute.xlu0 %1566
        %1568 = vrot.lane.b32.xlu0 %v1407, 14
        %v1569 = vpop.permute.xlu0 %1568
        %1570 = vrot.lane.b32.xlu0 %v1419, 14
        %v1571 = vpop.permute.xlu0 %1570
        %1572 = vrot.lane.b32.xlu0 %v1431, 14
        %v1573 = vpop.permute.xlu0 %1572
        %1574 = vrot.lane.b32.xlu0 %v1443, 14
        %v1575 = vpop.permute.xlu0 %1574
        %1576 = vrot.lane.b32.xlu0 %v1455, 14
        %v1577 = vpop.permute.xlu0 %1576
        %1578 = vrot.lane.b32.xlu0 %v1467, 14
        %v1579 = vpop.permute.xlu0 %1578
        %1580 = vrot.lane.b32.xlu0 %v1479, 14
        %v1581 = vpop.permute.xlu0 %1580
        %1582 = vrot.lane.b32.xlu0 %v1491, 14
        %v1583 = vpop.permute.xlu0 %1582
        %1584 = vrot.lane.b32.xlu0 %v1503, 14
        %v1585 = vpop.permute.xlu0 %1584
        %1586 = vrot.lane.b32.xlu0 %v1515, 14
        %v1587 = vpop.permute.xlu0 %1586
        %1588 = vrot.lane.b32.xlu0 %v1527, 14
        %v1589 = vpop.permute.xlu0 %1588
        %1590 = vrot.lane.b32.xlu0 %v1539, 14
        %v1591 = vpop.permute.xlu0 %1590
        %1592 = vrot.lane.b32.xlu0 %v1551, 14
        %v1593 = vpop.permute.xlu0 %1592
        %1594 = vrot.lane.b32.xlu0 %v1563, 14
        %v1595 = vpop.permute.xlu0 %1594
        %v1596 = vrot.slane %v1276, 1
        %v1597 = vrot.slane %v1356, 1
        %v1598 = vsel %vm667, %v1596, %v1597
        %v1599 = vrot.slane %v1277, 1
        %v1600 = vrot.slane %v1357, 1
        %v1601 = vsel %vm667, %v1599, %v1600
        %v1602 = vrot.slane %v1278, 1
        %v1603 = vrot.slane %v1358, 1
        %v1604 = vsel %vm667, %v1602, %v1603
        %v1605 = vrot.slane %v1279, 1
        %v1606 = vrot.slane %v1359, 1
        %v1607 = vsel %vm667, %v1605, %v1606
        %v1608 = vrot.slane %v1280, 1
        %v1609 = vrot.slane %v1360, 1
        %v1610 = vsel %vm667, %v1608, %v1609
        %v1611 = vrot.slane %v1281, 1
        %v1612 = vrot.slane %v1361, 1
        %v1613 = vsel %vm667, %v1611, %v1612
        %v1614 = vrot.slane %v1282, 1
        %v1615 = vrot.slane %v1362, 1
        %v1616 = vsel %vm667, %v1614, %v1615
        %v1617 = vrot.slane %v1283, 1
        %v1618 = vrot.slane %v1363, 1
        %v1619 = vsel %vm667, %v1617, %v1618
        %v1620 = vrot.slane %v1284, 1
        %v1621 = vrot.slane %v1364, 1
        %v1622 = vsel %vm667, %v1620, %v1621
        %v1623 = vrot.slane %v1285, 1
        %v1624 = vrot.slane %v1365, 1
        %v1625 = vsel %vm667, %v1623, %v1624
        %v1626 = vrot.slane %v1286, 1
        %v1627 = vrot.slane %v1366, 1
        %v1628 = vsel %vm667, %v1626, %v1627
        %v1629 = vrot.slane %v1287, 1
        %v1630 = vrot.slane %v1367, 1
        %v1631 = vsel %vm667, %v1629, %v1630
        %v1632 = vrot.slane %v1288, 1
        %v1633 = vrot.slane %v1368, 1
        %v1634 = vsel %vm667, %v1632, %v1633
        %v1635 = vrot.slane %v1289, 1
        %v1636 = vrot.slane %v1369, 1
        %v1637 = vsel %vm667, %v1635, %v1636
        %v1638 = vrot.slane %v1290, 1
        %v1639 = vrot.slane %v1370, 1
        %v1640 = vsel %vm667, %v1638, %v1639
        %v1641 = vrot.slane %v1291, 1
        %v1642 = vrot.slane %v1371, 1
        %v1643 = vsel %vm667, %v1641, %v1642
        %1644 = vrot.lane.b32.xlu0 %v1598, 16
        %v1645 = vpop.permute.xlu0 %1644
        %1646 = vrot.lane.b32.xlu0 %v1601, 16
        %v1647 = vpop.permute.xlu0 %1646
        %1648 = vrot.lane.b32.xlu0 %v1604, 16
        %v1649 = vpop.permute.xlu0 %1648
        %1650 = vrot.lane.b32.xlu0 %v1607, 16
        %v1651 = vpop.permute.xlu0 %1650
        %1652 = vrot.lane.b32.xlu0 %v1610, 16
        %v1653 = vpop.permute.xlu0 %1652
        %1654 = vrot.lane.b32.xlu0 %v1613, 16
        %v1655 = vpop.permute.xlu0 %1654
        %1656 = vrot.lane.b32.xlu0 %v1616, 16
        %v1657 = vpop.permute.xlu0 %1656
        %1658 = vrot.lane.b32.xlu0 %v1619, 16
        %v1659 = vpop.permute.xlu0 %1658
        %1660 = vrot.lane.b32.xlu0 %v1622, 16
        %v1661 = vpop.permute.xlu0 %1660
        %1662 = vrot.lane.b32.xlu0 %v1625, 16
        %v1663 = vpop.permute.xlu0 %1662
        %1664 = vrot.lane.b32.xlu0 %v1628, 16
        %v1665 = vpop.permute.xlu0 %1664
        %1666 = vrot.lane.b32.xlu0 %v1631, 16
        %v1667 = vpop.permute.xlu0 %1666
        %1668 = vrot.lane.b32.xlu0 %v1634, 16
        %v1669 = vpop.permute.xlu0 %1668
        %1670 = vrot.lane.b32.xlu0 %v1637, 16
        %v1671 = vpop.permute.xlu0 %1670
        %1672 = vrot.lane.b32.xlu0 %v1640, 16
        %v1673 = vpop.permute.xlu0 %1672
        %1674 = vrot.lane.b32.xlu0 %v1643, 16
        %v1675 = vpop.permute.xlu0 %1674
        %vm1676 = vcmask 15360
        %v1678 = vsel %vm1676, %v378, %v636
        %v1680 = vsel %vm1676, %v379, %v638
        %v1682 = vsel %vm1676, %v380, %v640
        %v1684 = vsel %vm1676, %v381, %v642
        %v1686 = vsel %vm1676, %v382, %v644
        %v1688 = vsel %vm1676, %v383, %v646
        %v1690 = vsel %vm1676, %v384, %v648
        %v1692 = vsel %vm1676, %v385, %v650
        %v1694 = vsel %vm1676, %v386, %v652
        %v1696 = vsel %vm1676, %v387, %v654
        %v1698 = vsel %vm1676, %v388, %v656
        %v1700 = vsel %vm1676, %v389, %v658
        %v1702 = vsel %vm1676, %v390, %v660
        %v1704 = vsel %vm1676, %v391, %v662
        %v1706 = vsel %vm1676, %v392, %v664
        %v1708 = vsel %vm1676, %v393, %v666
        %vm1709 = vcmask 31744
        %v1711 = vsel %vm1709, %v1678, %v717
        %v1713 = vsel %vm1709, %v1680, %v719
        %v1715 = vsel %vm1709, %v1682, %v721
        %v1717 = vsel %vm1709, %v1684, %v723
        %v1719 = vsel %vm1709, %v1686, %v725
        %v1721 = vsel %vm1709, %v1688, %v727
        %v1723 = vsel %vm1709, %v1690, %v729
        %v1725 = vsel %vm1709, %v1692, %v731
        %v1727 = vsel %vm1709, %v1694, %v733
        %v1729 = vsel %vm1709, %v1696, %v735
        %v1731 = vsel %vm1709, %v1698, %v737
        %v1733 = vsel %vm1709, %v1700, %v739
        %v1735 = vsel %vm1709, %v1702, %v741
        %v1737 = vsel %vm1709, %v1704, %v743
        %v1739 = vsel %vm1709, %v1706, %v745
        %v1741 = vsel %vm1709, %v1708, %v747
        %vm1742 = vcmask 48128
        %v1744 = vsel %vm1742, %v1711, %v829
        %v1746 = vsel %vm1742, %v1713, %v831
        %v1748 = vsel %vm1742, %v1715, %v833
        %v1750 = vsel %vm1742, %v1717, %v835
        %v1752 = vsel %vm1742, %v1719, %v837
        %v1754 = vsel %vm1742, %v1721, %v839
        %v1756 = vsel %vm1742, %v1723, %v841
        %v1758 = vsel %vm1742, %v1725, %v843
        %v1760 = vsel %vm1742, %v1727, %v845
        %v1762 = vsel %vm1742, %v1729, %v847
        %v1764 = vsel %vm1742, %v1731, %v849
        %v1766 = vsel %vm1742, %v1733, %v851
        %v1768 = vsel %vm1742, %v1735, %v853
        %v1770 = vsel %vm1742, %v1737, %v855
        %v1772 = vsel %vm1742, %v1739, %v857
        %v1774 = vsel %vm1742, %v1741, %v859
        %vm1775 = vcmask 64512
        %v1777 = vsel %vm1775, %v1744, %v1101
        %v1779 = vsel %vm1775, %v1746, %v1103
        %v1781 = vsel %vm1775, %v1748, %v1105
        %v1783 = vsel %vm1775, %v1750, %v1107
        %v1785 = vsel %vm1775, %v1752, %v1109
        %v1787 = vsel %vm1775, %v1754, %v1111
        %v1789 = vsel %vm1775, %v1756, %v1113
        %v1791 = vsel %vm1775, %v1758, %v1115
        %v1793 = vsel %vm1775, %v1760, %v1117
        %v1795 = vsel %vm1775, %v1762, %v1119
        %v1797 = vsel %vm1775, %v1764, %v1121
        %v1799 = vsel %vm1775, %v1766, %v1123
        %v1801 = vsel %vm1775, %v1768, %v1125
        %v1803 = vsel %vm1775, %v1770, %v1127
        %v1805 = vsel %vm1775, %v1772, %v1129
        %v1807 = vsel %vm1775, %v1774, %v1131
        %vm1808 = vcmask 80896
        %v1810 = vsel %vm1808, %v1777, %v1181
        %v1812 = vsel %vm1808, %v1779, %v1183
        %v1814 = vsel %vm1808, %v1781, %v1185
        %v1816 = vsel %vm1808, %v1783, %v1187
        %v1818 = vsel %vm1808, %v1785, %v1189
        %v1820 = vsel %vm1808, %v1787, %v1191
        %v1822 = vsel %vm1808, %v1789, %v1193
        %v1824 = vsel %vm1808, %v1791, %v1195
        %v1826 = vsel %vm1808, %v1793, %v1197
        %v1828 = vsel %vm1808, %v1795, %v1199
        %v1830 = vsel %vm1808, %v1797, %v1201
        %v1832 = vsel %vm1808, %v1799, %v1203
        %v1834 = vsel %vm1808, %v1801, %v1205
        %v1836 = vsel %vm1808, %v1803, %v1207
        %v1838 = vsel %vm1808, %v1805, %v1209
        %v1840 = vsel %vm1808, %v1807, %v1211
        %vm1841 = vcmask 97280
        %v1843 = vsel %vm1841, %v1810, %v1293
        %v1845 = vsel %vm1841, %v1812, %v1295
        %v1847 = vsel %vm1841, %v1814, %v1297
        %v1849 = vsel %vm1841, %v1816, %v1299
        %v1851 = vsel %vm1841, %v1818, %v1301
        %v1853 = vsel %vm1841, %v1820, %v1303
        %v1855 = vsel %vm1841, %v1822, %v1305
        %v1857 = vsel %vm1841, %v1824, %v1307
        %v1859 = vsel %vm1841, %v1826, %v1309
        %v1861 = vsel %vm1841, %v1828, %v1311
        %v1863 = vsel %vm1841, %v1830, %v1313
        %v1865 = vsel %vm1841, %v1832, %v1315
        %v1867 = vsel %vm1841, %v1834, %v1317
        %v1869 = vsel %vm1841, %v1836, %v1319
        %v1871 = vsel %vm1841, %v1838, %v1321
        %v1873 = vsel %vm1841, %v1840, %v1323
        %vm1874 = vcmask 113664
        %v1876 = vsel %vm1874, %v1843, %v1565
        %v1878 = vsel %vm1874, %v1845, %v1567
        %v1880 = vsel %vm1874, %v1847, %v1569
        %v1882 = vsel %vm1874, %v1849, %v1571
        %v1884 = vsel %vm1874, %v1851, %v1573
        %v1886 = vsel %vm1874, %v1853, %v1575
        %v1888 = vsel %vm1874, %v1855, %v1577
        %v1890 = vsel %vm1874, %v1857, %v1579
        %v1892 = vsel %vm1874, %v1859, %v1581
        %v1894 = vsel %vm1874, %v1861, %v1583
        %v1896 = vsel %vm1874, %v1863, %v1585
        %v1898 = vsel %vm1874, %v1865, %v1587
        %v1900 = vsel %vm1874, %v1867, %v1589
        %v1902 = vsel %vm1874, %v1869, %v1591
        %v1904 = vsel %vm1874, %v1871, %v1593
        %v1906 = vsel %vm1874, %v1873, %v1595
        %vm1907 = vcmask 130048
        %v1909 = vsel %vm1907, %v1876, %v1645
        %v1911 = vsel %vm1907, %v1878, %v1647
        %v1913 = vsel %vm1907, %v1880, %v1649
        %v1915 = vsel %vm1907, %v1882, %v1651
        %v1917 = vsel %vm1907, %v1884, %v1653
        %v1919 = vsel %vm1907, %v1886, %v1655
        %v1921 = vsel %vm1907, %v1888, %v1657
        %v1923 = vsel %vm1907, %v1890, %v1659
        %v1925 = vsel %vm1907, %v1892, %v1661
        %v1927 = vsel %vm1907, %v1894, %v1663
        %v1929 = vsel %vm1907, %v1896, %v1665
        %v1931 = vsel %vm1907, %v1898, %v1667
        %v1933 = vsel %vm1907, %v1900, %v1669
        %v1935 = vsel %vm1907, %v1902, %v1671
        %v1937 = vsel %vm1907, %v1904, %v1673
        %v1939 = vsel %vm1907, %v1906, %v1675
        %v1940 = vld [vmem:[%s1] sm:$0xf]
        %v1941 = vld [vmem:[%s1 + $0x4] sm:$0xf]
        %v1942 = vld [vmem:[%s1 + $0x8] sm:$0x1]
        %v1946 = vunpack.c.l.b16 %v1940
        %v1947 = vunpack.c.l.b16 %v1941
        %v1948 = vunpack.c.l.b16 %v1942
        %v1949 = vpack.c.b16 %v1947, %v1946
        %v1950 = vpack.c.b16 %v1948, %v1948
        %vm1952 = vcmask 146432
        %v1953 = vsel %vm1952, %v1909, 0
        %v1955 = vsel %vm1952, %v1911, 0
        %v1957 = vsel %vm1952, %v1913, 0
        %v1959 = vsel %vm1952, %v1915, 0
        %v1961 = vsel %vm1952, %v1917, 0
        %v1963 = vsel %vm1952, %v1919, 0
        %v1965 = vsel %vm1952, %v1921, 0
        %v1967 = vsel %vm1952, %v1923, 0
        %v1969 = vsel %vm1952, %v1925, 0
        %v1971 = vsel %vm1952, %v1927, 0
        %v1973 = vsel %vm1952, %v1929, 0
        %v1975 = vsel %vm1952, %v1931, 0
        %v1977 = vsel %vm1952, %v1933, 0
        %v1979 = vsel %vm1952, %v1935, 0
        %v1981 = vsel %vm1952, %v1937, 0
        %v1983 = vsel %vm1952, %v1939, 0
        %vm1985 = vcmask 1040384
        %v1987 = vsel %vm1985, %v1950, 0
        %1989 = vmatprep.subr.bf16.mxu0 0
        %1990 = vmatpush1.bf16.msra.mxu0 %v1949
        %1991 = vmatprep.subr.bf16.mxu0 0
        %1992 = vmatpush1.bf16.msra.mxu0 %v1987
        %1993 = vmatprep.subr.bf16.mxu0 0
        %1994 = vmatpush1.bf16.msra.mxu0 0
        %1995 = vmatprep.subr.bf16.mxu0 0
        %1996 = vmatpush1.bf16.msra.mxu0 0
        %1997 = vmatprep.subr.bf16.mxu0 0
        %1998 = vmatpush1.bf16.msra.mxu0 0
        %1999 = vmatprep.subr.bf16.mxu0 0
        %2000 = vmatpush1.bf16.msra.mxu0 0
        %2001 = vmatprep.subr.bf16.mxu0 0
        %2002 = vmatpush1.bf16.msra.mxu0 0
        %2003 = vmatprep.subr.bf16.mxu0 0
        %2004 = vmatpush1.bf16.msra.mxu0 0
        %2005 = vmatprep.subr.bf16.mxu0 0
        %2006 = vmatpush1.bf16.msra.mxu0 0
        %2007 = vmatprep.subr.bf16.mxu0 0
        %2008 = vmatpush1.bf16.msra.mxu0 0
        %2009 = vmatprep.subr.bf16.mxu0 0
        %2010 = vmatpush1.bf16.msra.mxu0 0
        %2011 = vmatprep.subr.bf16.mxu0 0
        %2012 = vmatpush1.bf16.msra.mxu0 0
        %2013 = vmatprep.subr.bf16.mxu0 0
        %2014 = vmatpush1.bf16.msra.mxu0 0
        %2015 = vmatprep.subr.bf16.mxu0 0
        %2016 = vmatpush1.bf16.msra.mxu0 0
        %2017 = vmatprep.subr.bf16.mxu0 0
        %2018 = vmatpush1.bf16.msra.mxu0 0
        %2019 = vmatprep.subr.bf16.mxu0 0
        %2020 = vmatpush1.bf16.msra.mxu0 0
        %2021 = vmatprep.mubr.bf16.mxu0 0
        %2022 = vmatmul.mubr.bf16.gmra.mrb[0].mxu0 %v1953
        %v2023 = vpop.f32.mrb[0].mxu0
        %v2024 = vadd.f32 0.0, %v2023
        %v2025 = vpop.f32.mrb[0].mxu0
        %v2026 = vpop.f32.mrb[0].mxu0
        %v2027 = vadd.f32 0.0, %v2026
        %v2028 = vpop.f32.mrb[0].mxu0
        %2029 = vmatprep.mubr.bf16.mxu0 0
        %2030 = vmatmul.mubr.bf16.gmra.mrb[0].mxu0 %v1955
        %v2031 = vpop.f32.mrb[0].mxu0
        %v2032 = vadd.f32 0.0, %v2031
        %v2033 = vpop.f32.mrb[0].mxu0
        %v2034 = vpop.f32.mrb[0].mxu0
        %v2035 = vadd.f32 0.0, %v2034
        %v2036 = vpop.f32.mrb[0].mxu0
        %2037 = vmatprep.mubr.bf16.mxu0 0
        %2038 = vmatmul.mubr.bf16.gmra.mrb[0].mxu0 %v1957
        %v2039 = vpop.f32.mrb[0].mxu0
        %v2040 = vadd.f32 0.0, %v2039
        %v2041 = vpop.f32.mrb[0].mxu0
        %v2042 = vpop.f32.mrb[0].mxu0
        %v2043 = vadd.f32 0.0, %v2042
        %v2044 = vpop.f32.mrb[0].mxu0
        %2045 = vmatprep.mubr.bf16.mxu0 0
        %2046 = vmatmul.mubr.bf16.gmra.mrb[0].mxu0 %v1959
        %v2047 = vpop.f32.mrb[0].mxu0
        %v2048 = vadd.f32 0.0, %v2047
        %v2049 = vpop.f32.mrb[0].mxu0
        %v2050 = vpop.f32.mrb[0].mxu0
        %v2051 = vadd.f32 0.0, %v2050
        %v2052 = vpop.f32.mrb[0].mxu0
        %2053 = vmatprep.mubr.bf16.mxu0 0
        %2054 = vmatmul.mubr.bf16.gmra.mrb[0].mxu0 %v1961
        %v2055 = vpop.f32.mrb[0].mxu0
        %v2056 = vadd.f32 0.0, %v2055
        %v2057 = vpop.f32.mrb[0].mxu0
        %v2058 = vpop.f32.mrb[0].mxu0
        %v2059 = vadd.f32 0.0, %v2058
        %v2060 = vpop.f32.mrb[0].mxu0
        %2061 = vmatprep.mubr.bf16.mxu0 0
        %2062 = vmatmul.mubr.bf16.gmra.mrb[0].mxu0 %v1963
        %v2063 = vpop.f32.mrb[0].mxu0
        %v2064 = vadd.f32 0.0, %v2063
        %v2065 = vpop.f32.mrb[0].mxu0
        %v2066 = vpop.f32.mrb[0].mxu0
        %v2067 = vadd.f32 0.0, %v2066
        %v2068 = vpop.f32.mrb[0].mxu0
        %2069 = vmatprep.mubr.bf16.mxu0 0
        %2070 = vmatmul.mubr.bf16.gmra.mrb[0].mxu0 %v1965
        %v2071 = vpop.f32.mrb[0].mxu0
        %v2072 = vadd.f32 0.0, %v2071
        %v2073 = vpop.f32.mrb[0].mxu0
        %v2074 = vpop.f32.mrb[0].mxu0
        %v2075 = vadd.f32 0.0, %v2074
        %v2076 = vpop.f32.mrb[0].mxu0
        %2077 = vmatprep.mubr.bf16.mxu0 0
        %2078 = vmatmul.mubr.bf16.gmra.mrb[0].mxu0 %v1967
        %v2079 = vpop.f32.mrb[0].mxu0
        %v2080 = vadd.f32 0.0, %v2079
        %v2081 = vpop.f32.mrb[0].mxu0
        %v2082 = vpop.f32.mrb[0].mxu0
        %v2083 = vadd.f32 0.0, %v2082
        %v2084 = vpop.f32.mrb[0].mxu0
        %2085 = vmatprep.mubr.bf16.mxu0 0
        %2086 = vmatmul.mubr.bf16.gmra.mrb[0].mxu0 %v1969
        %v2087 = vpop.f32.mrb[0].mxu0
        %v2088 = vadd.f32 0.0, %v2087
        %v2089 = vpop.f32.mrb[0].mxu0
        %v2090 = vpop.f32.mrb[0].mxu0
        %v2091 = vadd.f32 0.0, %v2090
        %v2092 = vpop.f32.mrb[0].mxu0
        %2093 = vmatprep.mubr.bf16.mxu0 0
        %2094 = vmatmul.mubr.bf16.gmra.mrb[0].mxu0 %v1971
        %v2095 = vpop.f32.mrb[0].mxu0
        %v2096 = vadd.f32 0.0, %v2095
        %v2097 = vpop.f32.mrb[0].mxu0
        %v2098 = vpop.f32.mrb[0].mxu0
        %v2099 = vadd.f32 0.0, %v2098
        %v2100 = vpop.f32.mrb[0].mxu0
        %2101 = vmatprep.mubr.bf16.mxu0 0
        %2102 = vmatmul.mubr.bf16.gmra.mrb[0].mxu0 %v1973
        %v2103 = vpop.f32.mrb[0].mxu0
        %v2104 = vadd.f32 0.0, %v2103
        %v2105 = vpop.f32.mrb[0].mxu0
        %v2106 = vpop.f32.mrb[0].mxu0
        %v2107 = vadd.f32 0.0, %v2106
        %v2108 = vpop.f32.mrb[0].mxu0
        %2109 = vmatprep.mubr.bf16.mxu0 0
        %2110 = vmatmul.mubr.bf16.gmra.mrb[0].mxu0 %v1975
        %v2111 = vpop.f32.mrb[0].mxu0
        %v2112 = vadd.f32 0.0, %v2111
        %v2113 = vpop.f32.mrb[0].mxu0
        %v2114 = vpop.f32.mrb[0].mxu0
        %v2115 = vadd.f32 0.0, %v2114
        %v2116 = vpop.f32.mrb[0].mxu0
        %2117 = vmatprep.mubr.bf16.mxu0 0
        %2118 = vmatmul.mubr.bf16.gmra.mrb[0].mxu0 %v1977
        %v2119 = vpop.f32.mrb[0].mxu0
        %v2120 = vadd.f32 0.0, %v2119
        %v2121 = vpop.f32.mrb[0].mxu0
        %v2122 = vpop.f32.mrb[0].mxu0
        %v2123 = vadd.f32 0.0, %v2122
        %v2124 = vpop.f32.mrb[0].mxu0
        %2125 = vmatprep.mubr.bf16.mxu0 0
        %2126 = vmatmul.mubr.bf16.gmra.mrb[0].mxu0 %v1979
        %v2127 = vpop.f32.mrb[0].mxu0
        %v2128 = vadd.f32 0.0, %v2127
        %v2129 = vpop.f32.mrb[0].mxu0
        %v2130 = vpop.f32.mrb[0].mxu0
        %v2131 = vadd.f32 0.0, %v2130
        %v2132 = vpop.f32.mrb[0].mxu0
        %2133 = vmatprep.mubr.bf16.mxu0 0
        %2134 = vmatmul.mubr.bf16.gmra.mrb[0].mxu0 %v1981
        %v2135 = vpop.f32.mrb[0].mxu0
        %v2136 = vadd.f32 0.0, %v2135
        %v2137 = vpop.f32.mrb[0].mxu0
        %v2138 = vpop.f32.mrb[0].mxu0
        %v2139 = vadd.f32 0.0, %v2138
        %v2140 = vpop.f32.mrb[0].mxu0
        %2141 = vmatprep.mubr.bf16.mxu0 0
        %2142 = vmatmul.mubr.bf16.gmra.mrb[0].mxu0 %v1983
        %v2143 = vpop.f32.mrb[0].mxu0
        %v2144 = vadd.f32 0.0, %v2143
        %v2145 = vpop.f32.mrb[0].mxu0
        %v2146 = vpop.f32.mrb[0].mxu0
        %v2147 = vadd.f32 0.0, %v2146
        %v2148 = vpop.f32.mrb[0].mxu0
        %2149 = vdwg.mxu0
        %2150 = vst [vmem:[%s150] sm:$0xff] %v2024
        %2151 = vst [vmem:[%s150 + $0x8] sm:$0xff] %v2027
        %2152 = vst [vmem:[%s150 + $0x10] sm:$0xff] %v2032
        %2153 = vst [vmem:[%s150 + $0x18] sm:$0xff] %v2035
        %2154 = vst [vmem:[%s150 + $0x20] sm:$0xff] %v2040
        %2155 = vst [vmem:[%s150 + $0x28] sm:$0xff] %v2043
        %2156 = vst [vmem:[%s150 + $0x30] sm:$0xff] %v2048
        %2157 = vst [vmem:[%s150 + $0x38] sm:$0xff] %v2051
        %2158 = vst [vmem:[%s150 + $0x40] sm:$0xff] %v2056
        %2159 = vst [vmem:[%s150 + $0x48] sm:$0xff] %v2059
        %2160 = vst [vmem:[%s150 + $0x50] sm:$0xff] %v2064
        %2161 = vst [vmem:[%s150 + $0x58] sm:$0xff] %v2067
        %2162 = vst [vmem:[%s150 + $0x60] sm:$0xff] %v2072
        %2163 = vst [vmem:[%s150 + $0x68] sm:$0xff] %v2075
        %2164 = vst [vmem:[%s150 + $0x70] sm:$0xff] %v2080
        %2165 = vst [vmem:[%s150 + $0x78] sm:$0xff] %v2083
        %2166 = vst [vmem:[%s150 + $0x80] sm:$0xff] %v2088
        %2167 = vst [vmem:[%s150 + $0x88] sm:$0xff] %v2091
        %2168 = vst [vmem:[%s150 + $0x90] sm:$0xff] %v2096
        %2169 = vst [vmem:[%s150 + $0x98] sm:$0xff] %v2099
        %2170 = vst [vmem:[%s150 + $0xa0] sm:$0xff] %v2104
        %2171 = vst [vmem:[%s150 + $0xa8] sm:$0xff] %v2107
        %2172 = vst [vmem:[%s150 + $0xb0] sm:$0xff] %v2112
        %2173 = vst [vmem:[%s150 + $0xb8] sm:$0xff] %v2115
        %2174 = vst [vmem:[%s150 + $0xc0] sm:$0xff] %v2120
        %2175 = vst [vmem:[%s150 + $0xc8] sm:$0xff] %v2123
        %2176 = vst [vmem:[%s150 + $0xd0] sm:$0xff] %v2128
        %2177 = vst [vmem:[%s150 + $0xd8] sm:$0xff] %v2131
        %2178 = vst [vmem:[%s150 + $0xe0] sm:$0xff] %v2136
        %2179 = vst [vmem:[%s150 + $0xe8] sm:$0xff] %v2139
        %2180 = vst [vmem:[%s150 + $0xf0] sm:$0xff] %v2144
        %2181 = vst [vmem:[%s150 + $0xf8] sm:$0xff] %v2147
        %s2182 = sand.u32 %s85, 1
        %s2183 = scalar_lea.sflag [#allocation3], %s2182
        %s2184 = sand.u32 %s85, 1
        %s2185 = smul.addr %s2184, 256
        %s2186 = scalar_lea.vmem [#allocation2], %s2185
        // Predicated region
        $region29: #{tpu_custom_call.1} parent=27 // pred_check
          %p2187 = pneg %p95
        $region30: #{tpu_custom_call.1} parent=27 // pred_check_branch
          %2189 = sbr.rel (%p2187) target = $region32
        $region31: #{tpu_custom_call.1} parent=27 // pred_region
          %s2190 = smul.u32 16, %s21
          %s2192 = ssub.s32 4096, 4096
          %2193 = vsyncadd %s2183, %s2192
          %s2194 = smul.addr %s2190, 2
          %s2195 = smul.addr %s20, 32
          %s2196 = sadd.s32 %s2194, %s2195
          %s2197 = smul.addr %s2196, 128
          %s2198 = scalar_lea.hbm %s2, %s2197
          %s2199 = sshll.u32 %s2186, 4
          %s2200 = int_to_ptr.vmem [resolvable:$true] %s2199
          %2205 = dma.vmem_to_hbm [thread:$0]  %s2200, 4096, %s2198, %s2183, 128, 128, 8
        $region32: #{tpu_custom_call.1} parent=27 // pred_fallthru
          _
      $region28: #{tpu_custom_call.1} parent=5 // pred_fallthru
        _
      %p2206 = scmp.le.s32.totalorder 2, %s11
      // Predicated region
      $region33: #{tpu_custom_call.1} parent=5 // pred_check
        %p2207 = pneg %p2206
      $region34: #{tpu_custom_call.1} parent=5 // pred_check_branch
        %2209 = sbr.rel (%p2207) target = $region36
      $region35: #{tpu_custom_call.1} parent=5 // pred_region
        %s2210 = ssub.s32 %s11, 2
        // Predicated region
        $region37: #{tpu_custom_call.1} parent=35 // pred_check
          %p2211 = pneg %p101
        $region38: #{tpu_custom_call.1} parent=35 // pred_check_branch
          %2213 = sbr.rel (%p2211) target = $region40
        $region39: #{tpu_custom_call.1} parent=35 // pred_region
          %s2214 = sand.u32 %s86, 1
          %s2215 = scalar_lea.sflag [#allocation3], %s2214
          %s2216 = sand.u32 %s86, 1
          %s2217 = smul.addr %s2216, 256
          %s2218 = scalar_lea.vmem [#allocation2], %s2217
          %2219 = dma.done %s2215, 4096
        $region40: #{tpu_custom_call.1} parent=35 // pred_fallthru
          _
      $region36: #{tpu_custom_call.1} parent=5 // pred_fallthru
        _
    $region6: #{tpu_custom_call.1} parent=1 // loop_footer
      %s15 = sadd.s32 1, %s11
    $region7: #{tpu_custom_call.1} parent=1 // loop_footer_branch
      %10 = sbr.rel target = $region3
    $region8: #{tpu_custom_call.1} parent=1 // loop_exit
      _
    %2220 = vsyncpa [#allocation3], 1
    %s2221 = scalar_lea.sflag [#allocation3], 1
    %2222 = vsyncpa %s2221, 1

</llo_original>
